<compile_context>
chip_gen: v7x
topology: tpu7x:2x2x1
jax: 0.10.0
libtpu: 0.0.40
codegen_flags: <defaults>
</compile_context>

<pallas_src>
import functools

import jax
import jax.numpy as jnp
from jax.experimental import pallas as pl
from jax.experimental.pallas import tpu as pltpu

NUM_CLASSES = 26
INPUT_DIM = 2048
HIDDEN_DIM = 256
PADDED_CLASSES = 128  # lane-dense output width (>= NUM_CLASSES)


def _round_up(x, m):
    return ((x + m - 1) // m) * m


def mlp_kernel(x_ref, w1_ref, b1_ref, w2_ref, b2_ref, o_ref):
    """Fused 2-layer MLP on one batch tile.

    x_ref : [TB, D_in]   f32  (VMEM, streamed)   -- cast to bf16 in-kernel
    w1_ref: [D_in, H]    bf16 (VMEM, resident)
    b1_ref: [1, H]       f32  (VMEM, resident)
    w2_ref: [H, C_pad]   bf16 (VMEM, resident)
    b2_ref: [1, C_pad]   f32  (VMEM, resident)
    o_ref : [TB, C_pad]  f32  (VMEM)
    """
    # In-kernel f32 -> bf16 cast of the streamed activations (VPU); HBM only ever
    # sees a single f32 read of x instead of a separate wrapper-side convert pass.
    x = x_ref[...].astype(jnp.bfloat16)
    # First linear: bf16 x bf16 -> f32 accumulate on the MXU, then bias + ReLU (VPU).
    h = jnp.dot(x, w1_ref[...], preferred_element_type=jnp.float32) + b1_ref[...]
    h = jnp.maximum(h, 0.0)
    # Dropout(p=0.3) is identity at inference time (eval-mode forward only).
    # TODO(synk): training-mode dropout would need pltpu.prng_seed/prng_random_bits masking.
    # Second linear: cast activations back to bf16 for the MXU, f32 accumulate + bias.
    out = jnp.dot(h.astype(w2_ref.dtype), w2_ref[...],
                  preferred_element_type=jnp.float32) + b2_ref[...]
    o_ref[...] = out.astype(o_ref.dtype)


def prepare_params(w1, b1, w2, b2):
    """One-time parameter prep (call once, outside the per-step forward):
    cast weights to bf16, pad the class dim to a lane-dense width, keep biases f32."""
    H = w1.shape[1]
    C = w2.shape[1]
    w1_p = w1.astype(jnp.bfloat16)
    w2_p = jnp.zeros((H, PADDED_CLASSES), jnp.bfloat16).at[:, :C].set(
        w2.astype(jnp.bfloat16))
    b1_p = b1.reshape(1, -1).astype(jnp.float32)
    b2_p = jnp.zeros((1, PADDED_CLASSES), jnp.float32).at[:, :C].set(
        b2.reshape(1, -1).astype(jnp.float32))
    return w1_p, b1_p, w2_p, b2_p


@functools.partial(jax.jit, static_argnames=("tile_b",))
def mlp_classifier_forward(x, w1_p, b1_p, w2_p, b2_p, *, tile_b=512):
    """x: [B, D_in] f32 -> logits [B, NUM_CLASSES] f32.

    Params must come from prepare_params().  x streams into the kernel as f32 (cast to
    bf16 in-kernel); weights stay fully resident in VMEM.  tile_b=512 reaches ~85% of
    HBM roofline (measured on v6e) and keeps total VMEM use ~11 MiB on every generation.
    """
    B, D_in = x.shape
    H = w1_p.shape[1]

    # Static tile selection:
    #  * multiple of 8 sublanes (f32 x tile), shrink for tiny batches;
    #  * for B > 256, cap the tile so the grid has >= ~4 "parallel" steps, which keeps
    #    both v7x TensorCores busy and gives the pipeline something to overlap.
    tb = min(tile_b, _round_up(B, 8))
    if B > 256:
        tb = min(tb, max(256, _round_up(pl.cdiv(B, 4), 8)))

    # Ragged tail: Pallas masks the out-of-bounds rows of the last block, so no
    # jnp.pad (= full HBM copy of x) is needed for non-divisible batches.
    grid = (pl.cdiv(B, tb),)
    b_work = grid[0] * tb

    flops = 2 * b_work * (D_in * H + H * PADDED_CLASSES)
    bytes_accessed = (b_work * D_in * 4            # x streamed as f32
                      + D_in * H * 2               # w1 (bf16)
                      + H * PADDED_CLASSES * 2     # w2 (bf16)
                      + (H + PADDED_CLASSES) * 4   # biases (f32)
                      + b_work * PADDED_CLASSES * 4)  # output (f32)

    out = pl.pallas_call(
        mlp_kernel,
        out_shape=jax.ShapeDtypeStruct((B, PADDED_CLASSES), jnp.float32),
        grid_spec=pltpu.PrefetchScalarGridSpec(
            num_scalar_prefetch=0,
            grid=grid,
            in_specs=[
                pl.BlockSpec((tb, D_in), lambda i: (i, 0)),           # x tile (streams, f32)
                pl.BlockSpec((D_in, H), lambda i: (0, 0)),            # w1 (resident)
                pl.BlockSpec((1, H), lambda i: (0, 0)),               # b1 (resident)
                pl.BlockSpec((H, PADDED_CLASSES), lambda i: (0, 0)),  # w2 padded (resident)
                pl.BlockSpec((1, PADDED_CLASSES), lambda i: (0, 0)),  # b2 padded (resident)
            ],
            out_specs=pl.BlockSpec((tb, PADDED_CLASSES), lambda i: (i, 0)),
        ),
        compiler_params=pltpu.CompilerParams(
            dimension_semantics=("parallel",),    # batch axis shards across v7x TCs
            vmem_limit_bytes=32 * 1024 * 1024,    # ~11 MiB used at tb=512; safe v5e/v6e/v7x
        ),
        cost_estimate=pl.CostEstimate(
            flops=flops, transcendentals=0, bytes_accessed=bytes_accessed),
    )(x, w1_p, b1_p, w2_p, b2_p)

    return out[:, :NUM_CLASSES]


def init_params(key, input_dim=INPUT_DIM, hidden_dim=HIDDEN_DIM,
                num_classes=NUM_CLASSES, dtype=jnp.float32):
    """Deterministic init matching torch.nn.Linear's U(-1/sqrt(fan_in), 1/sqrt(fan_in)).
    Weights stored as [in, out] (transposed from torch's [out, in])."""
    k1, k2, k3, k4 = jax.random.split(key, 4)
    bound1 = 1.0 / (input_dim ** 0.5)
    bound2 = 1.0 / (hidden_dim ** 0.5)
    w1 = jax.random.uniform(k1, (input_dim, hidden_dim), dtype, -bound1, bound1)
    b1 = jax.random.uniform(k2, (hidden_dim,), dtype, -bound1, bound1)
    w2 = jax.random.uniform(k3, (hidden_dim, num_classes), dtype, -bound2, bound2)
    b2 = jax.random.uniform(k4, (num_classes,), dtype, -bound2, bound2)
    return w1, b1, w2, b2


if __name__ == "__main__":
    key = jax.random.PRNGKey(0)
    kx, kp = jax.random.split(key)

    w1, b1, w2, b2 = init_params(kp)
    w1_p, b1_p, w2_p, b2_p = prepare_params(w1, b1, w2, b2)

    # Pure-JAX reference with the same bf16-operand / f32-accumulate math
    # (dropout is identity in eval).
    def reference(x):
        f32 = jnp.float32
        hp = jax.lax.Precision.HIGHEST
        xb = x.astype(jnp.bfloat16).astype(f32)
        w1b = w1.astype(jnp.bfloat16).astype(f32)
        w2b = w2.astype(jnp.bfloat16).astype(f32)
        h_ref = jnp.maximum(jnp.dot(xb, w1b, precision=hp) + b1, 0.0)
        return jnp.dot(h_ref.astype(jnp.bfloat16).astype(f32), w2b, precision=hp) + b2

    # B=37 exercises the single ragged tile; B=300 exercises a multi-step grid
    # (tb capped to 256 -> 2 "parallel" steps) with a masked ragged tail block.
    for B in (37, 300):
        x = jax.random.normal(jax.random.fold_in(kx, B), (B, INPUT_DIM), jnp.float32)
        logits = jax.block_until_ready(
            mlp_classifier_forward(x, w1_p, b1_p, w2_p, b2_p))
        ref = reference(x)
        assert logits.shape == (B, NUM_CLASSES), logits.shape
        assert jnp.allclose(logits, ref, atol=1e-2, rtol=1e-2), (
            f"mismatch vs reference at B={B}")

    print("KERNEL_OK")
</pallas_src>

<mosaic_0001>
module attributes {stable_mosaic.version = 11 : i64} {
  func.func @mlp_kernel(%arg0: i32, %arg1: memref<40x2048xf32, #tpu.memory_space<vmem>>, %arg2: memref<2048x256xbf16, #tpu.memory_space<vmem>>, %arg3: memref<1x256xf32, #tpu.memory_space<vmem>>, %arg4: memref<256x128xbf16, #tpu.memory_space<vmem>>, %arg5: memref<1x128xf32, #tpu.memory_space<vmem>>, %arg6: memref<40x128xf32, #tpu.memory_space<vmem>>) attributes {dimension_semantics = [#tpu.dimension_semantics<parallel>], iteration_bounds = array<i64: 1>, scalar_prefetch = 0 : i64, scratch_operands = 0 : i64, tpu.core_type = #tpu.core_type<tc>, window_params = [{transform_indices = @transform_0, window_bounds = array<i64: 40, 2048>}, {pipeline_mode = #tpu.pipeline_mode<synchronous>, transform_indices = @transform_1, window_bounds = array<i64: 2048, 256>}, {pipeline_mode = #tpu.pipeline_mode<synchronous>, transform_indices = @transform_2, window_bounds = array<i64: 1, 256>}, {pipeline_mode = #tpu.pipeline_mode<synchronous>, transform_indices = @transform_3, window_bounds = array<i64: 256, 128>}, {pipeline_mode = #tpu.pipeline_mode<synchronous>, transform_indices = @transform_4, window_bounds = array<i64: 1, 128>}, {transform_indices = @transform_5, window_bounds = array<i64: 40, 128>}]} {
    %c0 = arith.constant 0 : index
    %c0_0 = arith.constant 0 : index
    %0 = vector.load %arg1[%c0, %c0_0] : memref<40x2048xf32, #tpu.memory_space<vmem>>, vector<40x2048xf32>
    %1 = arith.truncf %0 : vector<40x2048xf32> to vector<40x2048xbf16>
    %c0_1 = arith.constant 0 : index
    %c0_2 = arith.constant 0 : index
    %2 = vector.load %arg2[%c0_1, %c0_2] : memref<2048x256xbf16, #tpu.memory_space<vmem>>, vector<2048x256xbf16>
    %cst = arith.constant dense<0.000000e+00> : vector<40x256xf32>
    %3 = tpu.matmul %1, %2, %cst {dimension_numbers = #tpu.dot_dimension_numbers<[1], [0], [0], [1], [0, 0, 1, 1], [], []>} : vector<40x2048xbf16>, vector<2048x256xbf16>, vector<40x256xf32> -> vector<40x256xf32>
    %c0_3 = arith.constant 0 : index
    %c0_4 = arith.constant 0 : index
    %4 = vector.load %arg3[%c0_3, %c0_4] : memref<1x256xf32, #tpu.memory_space<vmem>>, vector<1x256xf32>
    %5 = vector.broadcast %4 : vector<1x256xf32> to vector<40x256xf32>
    %6 = arith.addf %3, %5 : vector<40x256xf32>
    %cst_5 = arith.constant 0.000000e+00 : f32
    %7 = vector.broadcast %cst_5 : f32 to vector<40x256xf32>
    %8 = arith.maximumf %6, %7 : vector<40x256xf32>
    %9 = arith.truncf %8 : vector<40x256xf32> to vector<40x256xbf16>
    %c0_6 = arith.constant 0 : index
    %c0_7 = arith.constant 0 : index
    %10 = vector.load %arg4[%c0_6, %c0_7] : memref<256x128xbf16, #tpu.memory_space<vmem>>, vector<256x128xbf16>
    %cst_8 = arith.constant dense<0.000000e+00> : vector<40x128xf32>
    %11 = tpu.matmul %9, %10, %cst_8 {dimension_numbers = #tpu.dot_dimension_numbers<[1], [0], [0], [1], [0, 0, 1, 1], [], []>} : vector<40x256xbf16>, vector<256x128xbf16>, vector<40x128xf32> -> vector<40x128xf32>
    %c0_9 = arith.constant 0 : index
    %c0_10 = arith.constant 0 : index
    %12 = vector.load %arg5[%c0_9, %c0_10] : memref<1x128xf32, #tpu.memory_space<vmem>>, vector<1x128xf32>
    %13 = vector.broadcast %12 : vector<1x128xf32> to vector<40x128xf32>
    %14 = arith.addf %11, %13 : vector<40x128xf32>
    %c0_11 = arith.constant 0 : index
    %c0_12 = arith.constant 0 : index
    %15 = vector.load %arg6[%c0_11, %c0_12] : memref<40x128xf32, #tpu.memory_space<vmem>>, vector<40x128xf32>
    tpu.vector_store %arg6[%c0_11, %c0_12], %14 {strides = array<i32>} : memref<40x128xf32, #tpu.memory_space<vmem>>, vector<40x128xf32>,
    return
  }
  func.func @transform_0(%arg0: i32) -> (i32, i32) {
    %c0_i32 = arith.constant 0 : i32
    %c0_i32_0 = arith.constant 0 : i32
    return %arg0, %c0_i32 : i32, i32
  }
  func.func @transform_1(%arg0: i32) -> (i32, i32) {
    %c0_i32 = arith.constant 0 : i32
    %c0_i32_0 = arith.constant 0 : i32
    %c0_i32_1 = arith.constant 0 : i32
    return %c0_i32, %c0_i32_0 : i32, i32
  }
  func.func @transform_2(%arg0: i32) -> (i32, i32) {
    %c0_i32 = arith.constant 0 : i32
    %c0_i32_0 = arith.constant 0 : i32
    %c0_i32_1 = arith.constant 0 : i32
    return %c0_i32, %c0_i32_0 : i32, i32
  }
  func.func @transform_3(%arg0: i32) -> (i32, i32) {
    %c0_i32 = arith.constant 0 : i32
    %c0_i32_0 = arith.constant 0 : i32
    %c0_i32_1 = arith.constant 0 : i32
    return %c0_i32, %c0_i32_0 : i32, i32
  }
  func.func @transform_4(%arg0: i32) -> (i32, i32) {
    %c0_i32 = arith.constant 0 : i32
    %c0_i32_0 = arith.constant 0 : i32
    %c0_i32_1 = arith.constant 0 : i32
    return %c0_i32, %c0_i32_0 : i32, i32
  }
  func.func @transform_5(%arg0: i32) -> (i32, i32) {
    %c0_i32 = arith.constant 0 : i32
    %c0_i32_0 = arith.constant 0 : i32
    return %arg0, %c0_i32 : i32, i32
  }
}

</mosaic_0001>

<llo_original>
// kernel: mlp_classifier_forward.1
$region0: #{mlp_classifier_forward.1}
  #allocation0 [shape = 'u32[]', space=smem, size = 0x4, offset = 0x4, fixed_abs, tag = 'smem constant byte address 0x4 - core index']
  #allocation1 [shape = 'u32[144,128]{1,0:T(1,128)}', space=vmem, size = 0x12000, scoped, tag = 'internal scratch']
  %s0 = inlined_call_operand.hbm [shape: f32[37,2048], index: 0, kind: input, shape index: {}]
  %s1 = inlined_call_operand.hbm [shape: bf16[2048,256], index: 1, kind: input, shape index: {}]
  %s2 = inlined_call_operand.vmem [shape: f32[1,256], index: 2, kind: input, shape index: {}]
  %s3 = inlined_call_operand.hbm [shape: bf16[256,128], index: 3, kind: input, shape index: {}]
  %s4 = inlined_call_operand.vmem [shape: f32[1,128], index: 4, kind: input, shape index: {}]
  %s5 = inlined_call_operand.vmem [shape: f32[37,128], index: 5, kind: output, shape index: {}]
  %s6 = sld [smem:[#allocation0]]
  $region42: #{mlp_classifier_forward.1} parent=0
    _
  %s8 = ssub.s32 1, %s6
  %s9 = scalar_select 0, %s8, %s6
  $region1: #{mlp_classifier_forward.1} parent=0
    #allocation2 [shape = 'u8[327680]{0}', space=vmem, size = 0x50000, scoped, tag = 'input window, operand 0, single buffered']
    #allocation3 [shape = 's32[1]{0}', space=sflag, size = 0x4, scoped, tag = 'scoped memory for mlp_classifier_forward.1']
    #allocation4 [shape = 'u8[1048576]{0}', space=vmem, size = 0x100000, scoped, tag = 'input window, operand 1, single buffered']
    #allocation5 [shape = 's32[1]{0}', space=sflag, size = 0x4, scoped, tag = 'scoped memory for mlp_classifier_forward.1']
    #allocation6 [shape = 'u8[65536]{0}', space=vmem, size = 0x10000, scoped, tag = 'input window, operand 3, single buffered']
    %10 = vsyncpa [#allocation3], 0
    %11 = vsyncpa [#allocation5], 0
    // Predicated region
    $region2: #{mlp_classifier_forward.1} parent=1 // pred_check
      _
    $region3: #{mlp_classifier_forward.1} parent=1 // pred_check_branch
      %13 = sbr.rel (0) target = $region5
    $region4: #{mlp_classifier_forward.1} parent=1 // pred_region
      %s15 = ssub.s32 10240, 10240
      %16 = vsyncadd [#allocation3], %s15
      %s17 = sshll.u32 [#allocation2], 4
      %s18 = int_to_ptr.vmem [resolvable:$true] %s17
      %23 = dma.hbm_to_vmem [thread:$0]  %s0, 10240, %s18, [#allocation3], 2048, 2048, 128
    $region5: #{mlp_classifier_forward.1} parent=1 // pred_fallthru
      _
    // Predicated region
    $region6: #{mlp_classifier_forward.1} parent=1 // pred_check
      _
    $region7: #{mlp_classifier_forward.1} parent=1 // pred_check_branch
      %25 = sbr.rel (0) target = $region9
    $region8: #{mlp_classifier_forward.1} parent=1 // pred_region
      %s27 = ssub.s32 32768, 32768
      %28 = vsyncadd [#allocation5], %s27
      %s29 = sshll.u32 [#allocation4], 4
      %s30 = int_to_ptr.vmem [resolvable:$true] %s29
      %35 = dma.hbm_to_vmem [thread:$0]  %s1, 32768, %s30, [#allocation5], 128, 128, 8
    $region9: #{mlp_classifier_forward.1} parent=1 // pred_fallthru
      _
    // Predicated region
    $region10: #{mlp_classifier_forward.1} parent=1 // pred_check
      _
    $region11: #{mlp_classifier_forward.1} parent=1 // pred_check_branch
      %37 = sbr.rel (0) target = $region13
    $region12: #{mlp_classifier_forward.1} parent=1 // pred_region
      _
    $region13: #{mlp_classifier_forward.1} parent=1 // pred_fallthru
      _
    // Predicated region
    $region14: #{mlp_classifier_forward.1} parent=1 // pred_check
      _
    $region15: #{mlp_classifier_forward.1} parent=1 // pred_check_branch
      %39 = sbr.rel (0) target = $region17
    $region16: #{mlp_classifier_forward.1} parent=1 // pred_region
      %s41 = ssub.s32 2048, 2048
      %42 = vsyncadd [#allocation5], %s41
      %s43 = sshll.u32 [#allocation6], 4
      %s44 = int_to_ptr.vmem [resolvable:$true] %s43
      %49 = dma.hbm_to_vmem [thread:$0]  %s3, 2048, %s44, [#allocation5], 64, 64, 4
    $region17: #{mlp_classifier_forward.1} parent=1 // pred_fallthru
      _
    // Predicated region
    $region18: #{mlp_classifier_forward.1} parent=1 // pred_check
      _
    $region19: #{mlp_classifier_forward.1} parent=1 // pred_check_branch
      %51 = sbr.rel (0) target = $region21
    $region20: #{mlp_classifier_forward.1} parent=1 // pred_region
      _
    $region21: #{mlp_classifier_forward.1} parent=1 // pred_fallthru
      _
    // Predicated region
    $region22: #{mlp_classifier_forward.1} parent=1 // pred_check
      _
    $region23: #{mlp_classifier_forward.1} parent=1 // pred_check_branch
      %53 = sbr.rel (0) target = $region25
    $region24: #{mlp_classifier_forward.1} parent=1 // pred_region
      %54 = dma.done [#allocation3], 10240
    $region25: #{mlp_classifier_forward.1} parent=1 // pred_fallthru
      _
    // Predicated region
    $region26: #{mlp_classifier_forward.1} parent=1 // pred_check
      _
    $region27: #{mlp_classifier_forward.1} parent=1 // pred_check_branch
      %56 = sbr.rel (0) target = $region29
    $region28: #{mlp_classifier_forward.1} parent=1 // pred_region
      %57 = dma.done [#allocation5], 32768
    $region29: #{mlp_classifier_forward.1} parent=1 // pred_fallthru
      _
    // Predicated region
    $region30: #{mlp_classifier_forward.1} parent=1 // pred_check
      _
    $region31: #{mlp_classifier_forward.1} parent=1 // pred_check_branch
      %59 = sbr.rel (0) target = $region33
    $region32: #{mlp_classifier_forward.1} parent=1 // pred_region
      %60 = dma.done [#allocation5], 2048
    $region33: #{mlp_classifier_forward.1} parent=1 // pred_fallthru
      _
    %v62 = vld [vmem:[#allocation2] sm:$0xff]
    %v63 = vld [vmem:[#allocation2 + $0x8] sm:$0xff]
    %v64 = vld [vmem:[#allocation2 + $0x10] sm:$0xff]
    %v65 = vld [vmem:[#allocation2 + $0x18] sm:$0xff]
    %v66 = vld [vmem:[#allocation2 + $0x20] sm:$0xff]
    %v67 = vld [vmem:[#allocation2 + $0x28] sm:$0xff]
    %v68 = vld [vmem:[#allocation2 + $0x30] sm:$0xff]
    %v69 = vld [vmem:[#allocation2 + $0x38] sm:$0xff]
    %v70 = vld [vmem:[#allocation2 + $0x40] sm:$0xff]
    %v71 = vld [vmem:[#allocation2 + $0x48] sm:$0xff]
    %v72 = vld [vmem:[#allocation2 + $0x50] sm:$0xff]
    %v73 = vld [vmem:[#allocation2 + $0x58] sm:$0xff]
    %v74 = vld [vmem:[#allocation2 + $0x60] sm:$0xff]
    %v75 = vld [vmem:[#allocation2 + $0x68] sm:$0xff]
    %v76 = vld [vmem:[#allocation2 + $0x70] sm:$0xff]
    %v77 = vld [vmem:[#allocation2 + $0x78] sm:$0xff]
    %v78 = vld [vmem:[#allocation2 + $0x80] sm:$0xff]
    %v79 = vld [vmem:[#allocation2 + $0x88] sm:$0xff]
    %v80 = vld [vmem:[#allocation2 + $0x90] sm:$0xff]
    %v81 = vld [vmem:[#allocation2 + $0x98] sm:$0xff]
    %v82 = vld [vmem:[#allocation2 + $0xa0] sm:$0xff]
    %v83 = vld [vmem:[#allocation2 + $0xa8] sm:$0xff]
    %v84 = vld [vmem:[#allocation2 + $0xb0] sm:$0xff]
    %v85 = vld [vmem:[#allocation2 + $0xb8] sm:$0xff]
    %v86 = vld [vmem:[#allocation2 + $0xc0] sm:$0xff]
    %v87 = vld [vmem:[#allocation2 + $0xc8] sm:$0xff]
    %v88 = vld [vmem:[#allocation2 + $0xd0] sm:$0xff]
    %v89 = vld [vmem:[#allocation2 + $0xd8] sm:$0xff]
    %v90 = vld [vmem:[#allocation2 + $0xe0] sm:$0xff]
    %v91 = vld [vmem:[#allocation2 + $0xe8] sm:$0xff]
    %v92 = vld [vmem:[#allocation2 + $0xf0] sm:$0xff]
    %v93 = vld [vmem:[#allocation2 + $0xf8] sm:$0xff]
    %v94 = vld [vmem:[#allocation2 + $0x100] sm:$0xff]
    %v95 = vld [vmem:[#allocation2 + $0x108] sm:$0xff]
    %v96 = vld [vmem:[#allocation2 + $0x110] sm:$0xff]
    %v97 = vld [vmem:[#allocation2 + $0x118] sm:$0xff]
    %v98 = vld [vmem:[#allocation2 + $0x120] sm:$0xff]
    %v99 = vld [vmem:[#allocation2 + $0x128] sm:$0xff]
    %v100 = vld [vmem:[#allocation2 + $0x130] sm:$0xff]
    %v101 = vld [vmem:[#allocation2 + $0x138] sm:$0xff]
    %v102 = vld [vmem:[#allocation2 + $0x140] sm:$0xff]
    %v103 = vld [vmem:[#allocation2 + $0x148] sm:$0xff]
    %v104 = vld [vmem:[#allocation2 + $0x150] sm:$0xff]
    %v105 = vld [vmem:[#allocation2 + $0x158] sm:$0xff]
    %v106 = vld [vmem:[#allocation2 + $0x160] sm:$0xff]
    %v107 = vld [vmem:[#allocation2 + $0x168] sm:$0xff]
    %v108 = vld [vmem:[#allocation2 + $0x170] sm:$0xff]
    %v109 = vld [vmem:[#allocation2 + $0x178] sm:$0xff]
    %v110 = vld [vmem:[#allocation2 + $0x180] sm:$0xff]
    %v111 = vld [vmem:[#allocation2 + $0x188] sm:$0xff]
    %v112 = vld [vmem:[#allocation2 + $0x190] sm:$0xff]
    %v113 = vld [vmem:[#allocation2 + $0x198] sm:$0xff]
    %v114 = vld [vmem:[#allocation2 + $0x1a0] sm:$0xff]
    %v115 = vld [vmem:[#allocation2 + $0x1a8] sm:$0xff]
    %v116 = vld [vmem:[#allocation2 + $0x1b0] sm:$0xff]
    %v117 = vld [vmem:[#allocation2 + $0x1b8] sm:$0xff]
    %v118 = vld [vmem:[#allocation2 + $0x1c0] sm:$0xff]
    %v119 = vld [vmem:[#allocation2 + $0x1c8] sm:$0xff]
    %v120 = vld [vmem:[#allocation2 + $0x1d0] sm:$0xff]
    %v121 = vld [vmem:[#allocation2 + $0x1d8] sm:$0xff]
    %v122 = vld [vmem:[#allocation2 + $0x1e0] sm:$0xff]
    %v123 = vld [vmem:[#allocation2 + $0x1e8] sm:$0xff]
    %v124 = vld [vmem:[#allocation2 + $0x1f0] sm:$0xff]
    %v125 = vld [vmem:[#allocation2 + $0x1f8] sm:$0xff]
    %v126 = vld [vmem:[#allocation2 + $0x200] sm:$0xff]
    %v127 = vld [vmem:[#allocation2 + $0x208] sm:$0xff]
    %v128 = vld [vmem:[#allocation2 + $0x210] sm:$0xff]
    %v129 = vld [vmem:[#allocation2 + $0x218] sm:$0xff]
    %v130 = vld [vmem:[#allocation2 + $0x220] sm:$0xff]
    %v131 = vld [vmem:[#allocation2 + $0x228] sm:$0xff]
    %v132 = vld [vmem:[#allocation2 + $0x230] sm:$0xff]
    %v133 = vld [vmem:[#allocation2 + $0x238] sm:$0xff]
    %v134 = vld [vmem:[#allocation2 + $0x240] sm:$0xff]
    %v135 = vld [vmem:[#allocation2 + $0x248] sm:$0xff]
    %v136 = vld [vmem:[#allocation2 + $0x250] sm:$0xff]
    %v137 = vld [vmem:[#allocation2 + $0x258] sm:$0xff]
    %v138 = vld [vmem:[#allocation2 + $0x260] sm:$0xff]
    %v139 = vld [vmem:[#allocation2 + $0x268] sm:$0xff]
    %v140 = vld [vmem:[#allocation2 + $0x270] sm:$0xff]
    %v141 = vld [vmem:[#allocation2 + $0x278] sm:$0xff]
    %v142 = vpack.c.bf16 %v78, %v62
    %v143 = vpack.c.bf16 %v79, %v63
    %v144 = vpack.c.bf16 %v80, %v64
    %v145 = vpack.c.bf16 %v81, %v65
    %v146 = vpack.c.bf16 %v82, %v66
    %v147 = vpack.c.bf16 %v83, %v67
    %v148 = vpack.c.bf16 %v84, %v68
    %v149 = vpack.c.bf16 %v85, %v69
    %v150 = vpack.c.bf16 %v86, %v70
    %v151 = vpack.c.bf16 %v87, %v71
    %v152 = vpack.c.bf16 %v88, %v72
    %v153 = vpack.c.bf16 %v89, %v73
    %v154 = vpack.c.bf16 %v90, %v74
    %v155 = vpack.c.bf16 %v91, %v75
    %v156 = vpack.c.bf16 %v92, %v76
    %v157 = vpack.c.bf16 %v93, %v77
    %v158 = vpack.c.bf16 %v110, %v94
    %v159 = vpack.c.bf16 %v111, %v95
    %v160 = vpack.c.bf16 %v112, %v96
    %v161 = vpack.c.bf16 %v113, %v97
    %v162 = vpack.c.bf16 %v114, %v98
    %v163 = vpack.c.bf16 %v115, %v99
    %v164 = vpack.c.bf16 %v116, %v100
    %v165 = vpack.c.bf16 %v117, %v101
    %v166 = vpack.c.bf16 %v118, %v102
    %v167 = vpack.c.bf16 %v119, %v103
    %v168 = vpack.c.bf16 %v120, %v104
    %v169 = vpack.c.bf16 %v121, %v105
    %v170 = vpack.c.bf16 %v122, %v106
    %v171 = vpack.c.bf16 %v123, %v107
    %v172 = vpack.c.bf16 %v124, %v108
    %v173 = vpack.c.bf16 %v125, %v109
    %v174 = vpack.c.bf16 %v126, %v126
    %v175 = vpack.c.bf16 %v127, %v127
    %v176 = vpack.c.bf16 %v128, %v128
    %v177 = vpack.c.bf16 %v129, %v129
    %v178 = vpack.c.bf16 %v130, %v130
    %v179 = vpack.c.bf16 %v131, %v131
    %v180 = vpack.c.bf16 %v132, %v132
    %v181 = vpack.c.bf16 %v133, %v133
    %v182 = vpack.c.bf16 %v134, %v134
    %v183 = vpack.c.bf16 %v135, %v135
    %v184 = vpack.c.bf16 %v136, %v136
    %v185 = vpack.c.bf16 %v137, %v137
    %v186 = vpack.c.bf16 %v138, %v138
    %v187 = vpack.c.bf16 %v139, %v139
    %v188 = vpack.c.bf16 %v140, %v140
    %v189 = vpack.c.bf16 %v141, %v141
    %v190 = vld [vmem:[#allocation4] sm:$0xff]
    %v191 = vld [vmem:[#allocation4 + $0x8] sm:$0xff]
    %v192 = vld [vmem:[#allocation4 + $0x10] sm:$0xff]
    %v193 = vld [vmem:[#allocation4 + $0x18] sm:$0xff]
    %v194 = vld [vmem:[#allocation4 + $0x20] sm:$0xff]
    %v195 = vld [vmem:[#allocation4 + $0x28] sm:$0xff]
    %v196 = vld [vmem:[#allocation4 + $0x30] sm:$0xff]
    %v197 = vld [vmem:[#allocation4 + $0x38] sm:$0xff]
    %v198 = vld [vmem:[#allocation4 + $0x40] sm:$0xff]
    %v199 = vld [vmem:[#allocation4 + $0x48] sm:$0xff]
    %v200 = vld [vmem:[#allocation4 + $0x50] sm:$0xff]
    %v201 = vld [vmem:[#allocation4 + $0x58] sm:$0xff]
    %v202 = vld [vmem:[#allocation4 + $0x60] sm:$0xff]
    %v203 = vld [vmem:[#allocation4 + $0x68] sm:$0xff]
    %v204 = vld [vmem:[#allocation4 + $0x70] sm:$0xff]
    %v205 = vld [vmem:[#allocation4 + $0x78] sm:$0xff]
    %v206 = vld [vmem:[#allocation4 + $0x80] sm:$0xff]
    %v207 = vld [vmem:[#allocation4 + $0x88] sm:$0xff]
    %v208 = vld [vmem:[#allocation4 + $0x90] sm:$0xff]
    %v209 = vld [vmem:[#allocation4 + $0x98] sm:$0xff]
    %v210 = vld [vmem:[#allocation4 + $0xa0] sm:$0xff]
    %v211 = vld [vmem:[#allocation4 + $0xa8] sm:$0xff]
    %v212 = vld [vmem:[#allocation4 + $0xb0] sm:$0xff]
    %v213 = vld [vmem:[#allocation4 + $0xb8] sm:$0xff]
    %v214 = vld [vmem:[#allocation4 + $0xc0] sm:$0xff]
    %v215 = vld [vmem:[#allocation4 + $0xc8] sm:$0xff]
    %v216 = vld [vmem:[#allocation4 + $0xd0] sm:$0xff]
    %v217 = vld [vmem:[#allocation4 + $0xd8] sm:$0xff]
    %v218 = vld [vmem:[#allocation4 + $0xe0] sm:$0xff]
    %v219 = vld [vmem:[#allocation4 + $0xe8] sm:$0xff]
    %v220 = vld [vmem:[#allocation4 + $0xf0] sm:$0xff]
    %v221 = vld [vmem:[#allocation4 + $0xf8] sm:$0xff]
    %v222 = vld [vmem:[#allocation4 + $0x100] sm:$0xff]
    %v223 = vld [vmem:[#allocation4 + $0x108] sm:$0xff]
    %v224 = vld [vmem:[#allocation4 + $0x110] sm:$0xff]
    %v225 = vld [vmem:[#allocation4 + $0x118] sm:$0xff]
    %v226 = vld [vmem:[#allocation4 + $0x120] sm:$0xff]
    %v227 = vld [vmem:[#allocation4 + $0x128] sm:$0xff]
    %v228 = vld [vmem:[#allocation4 + $0x130] sm:$0xff]
    %v229 = vld [vmem:[#allocation4 + $0x138] sm:$0xff]
    %v230 = vld [vmem:[#allocation4 + $0x140] sm:$0xff]
    %v231 = vld [vmem:[#allocation4 + $0x148] sm:$0xff]
    %v232 = vld [vmem:[#allocation4 + $0x150] sm:$0xff]
    %v233 = vld [vmem:[#allocation4 + $0x158] sm:$0xff]
    %v234 = vld [vmem:[#allocation4 + $0x160] sm:$0xff]
    %v235 = vld [vmem:[#allocation4 + $0x168] sm:$0xff]
    %v236 = vld [vmem:[#allocation4 + $0x170] sm:$0xff]
    %v237 = vld [vmem:[#allocation4 + $0x178] sm:$0xff]
    %v238 = vld [vmem:[#allocation4 + $0x180] sm:$0xff]
    %v239 = vld [vmem:[#allocation4 + $0x188] sm:$0xff]
    %v240 = vld [vmem:[#allocation4 + $0x190] sm:$0xff]
    %v241 = vld [vmem:[#allocation4 + $0x198] sm:$0xff]
    %v242 = vld [vmem:[#allocation4 + $0x1a0] sm:$0xff]
    %v243 = vld [vmem:[#allocation4 + $0x1a8] sm:$0xff]
    %v244 = vld [vmem:[#allocation4 + $0x1b0] sm:$0xff]
    %v245 = vld [vmem:[#allocation4 + $0x1b8] sm:$0xff]
    %v246 = vld [vmem:[#allocation4 + $0x1c0] sm:$0xff]
    %v247 = vld [vmem:[#allocation4 + $0x1c8] sm:$0xff]
    %v248 = vld [vmem:[#allocation4 + $0x1d0] sm:$0xff]
    %v249 = vld [vmem:[#allocation4 + $0x1d8] sm:$0xff]
    %v250 = vld [vmem:[#allocation4 + $0x1e0] sm:$0xff]
    %v251 = vld [vmem:[#allocation4 + $0x1e8] sm:$0xff]
    %v252 = vld [vmem:[#allocation4 + $0x1f0] sm:$0xff]
    %v253 = vld [vmem:[#allocation4 + $0x1f8] sm:$0xff]
    %v254 = vld [vmem:[#allocation4 + $0x200] sm:$0xff]
    %v255 = vld [vmem:[#allocation4 + $0x208] sm:$0xff]
    %v256 = vld [vmem:[#allocation4 + $0x210] sm:$0xff]
    %v257 = vld [vmem:[#allocation4 + $0x218] sm:$0xff]
    %v258 = vld [vmem:[#allocation4 + $0x220] sm:$0xff]
    %v259 = vld [vmem:[#allocation4 + $0x228] sm:$0xff]
    %v260 = vld [vmem:[#allocation4 + $0x230] sm:$0xff]
    %v261 = vld [vmem:[#allocation4 + $0x238] sm:$0xff]
    %v262 = vld [vmem:[#allocation4 + $0x240] sm:$0xff]
    %v263 = vld [vmem:[#allocation4 + $0x248] sm:$0xff]
    %v264 = vld [vmem:[#allocation4 + $0x250] sm:$0xff]
    %v265 = vld [vmem:[#allocation4 + $0x258] sm:$0xff]
    %v266 = vld [vmem:[#allocation4 + $0x260] sm:$0xff]
    %v267 = vld [vmem:[#allocation4 + $0x268] sm:$0xff]
    %v268 = vld [vmem:[#allocation4 + $0x270] sm:$0xff]
    %v269 = vld [vmem:[#allocation4 + $0x278] sm:$0xff]
    %v270 = vld [vmem:[#allocation4 + $0x280] sm:$0xff]
    %v271 = vld [vmem:[#allocation4 + $0x288] sm:$0xff]
    %v272 = vld [vmem:[#allocation4 + $0x290] sm:$0xff]
    %v273 = vld [vmem:[#allocation4 + $0x298] sm:$0xff]
    %v274 = vld [vmem:[#allocation4 + $0x2a0] sm:$0xff]
    %v275 = vld [vmem:[#allocation4 + $0x2a8] sm:$0xff]
    %v276 = vld [vmem:[#allocation4 + $0x2b0] sm:$0xff]
    %v277 = vld [vmem:[#allocation4 + $0x2b8] sm:$0xff]
    %v278 = vld [vmem:[#allocation4 + $0x2c0] sm:$0xff]
    %v279 = vld [vmem:[#allocation4 + $0x2c8] sm:$0xff]
    %v280 = vld [vmem:[#allocation4 + $0x2d0] sm:$0xff]
    %v281 = vld [vmem:[#allocation4 + $0x2d8] sm:$0xff]
    %v282 = vld [vmem:[#allocation4 + $0x2e0] sm:$0xff]
    %v283 = vld [vmem:[#allocation4 + $0x2e8] sm:$0xff]
    %v284 = vld [vmem:[#allocation4 + $0x2f0] sm:$0xff]
    %v285 = vld [vmem:[#allocation4 + $0x2f8] sm:$0xff]
    %v286 = vld [vmem:[#allocation4 + $0x300] sm:$0xff]
    %v287 = vld [vmem:[#allocation4 + $0x308] sm:$0xff]
    %v288 = vld [vmem:[#allocation4 + $0x310] sm:$0xff]
    %v289 = vld [vmem:[#allocation4 + $0x318] sm:$0xff]
    %v290 = vld [vmem:[#allocation4 + $0x320] sm:$0xff]
    %v291 = vld [vmem:[#allocation4 + $0x328] sm:$0xff]
    %v292 = vld [vmem:[#allocation4 + $0x330] sm:$0xff]
    %v293 = vld [vmem:[#allocation4 + $0x338] sm:$0xff]
    %v294 = vld [vmem:[#allocation4 + $0x340] sm:$0xff]
    %v295 = vld [vmem:[#allocation4 + $0x348] sm:$0xff]
    %v296 = vld [vmem:[#allocation4 + $0x350] sm:$0xff]
    %v297 = vld [vmem:[#allocation4 + $0x358] sm:$0xff]
    %v298 = vld [vmem:[#allocation4 + $0x360] sm:$0xff]
    %v299 = vld [vmem:[#allocation4 + $0x368] sm:$0xff]
    %v300 = vld [vmem:[#allocation4 + $0x370] sm:$0xff]
    %v301 = vld [vmem:[#allocation4 + $0x378] sm:$0xff]
    %v302 = vld [vmem:[#allocation4 + $0x380] sm:$0xff]
    %v303 = vld [vmem:[#allocation4 + $0x388] sm:$0xff]
    %v304 = vld [vmem:[#allocation4 + $0x390] sm:$0xff]
    %v305 = vld [vmem:[#allocation4 + $0x398] sm:$0xff]
    %v306 = vld [vmem:[#allocation4 + $0x3a0] sm:$0xff]
    %v307 = vld [vmem:[#allocation4 + $0x3a8] sm:$0xff]
    %v308 = vld [vmem:[#allocation4 + $0x3b0] sm:$0xff]
    %v309 = vld [vmem:[#allocation4 + $0x3b8] sm:$0xff]
    %v310 = vld [vmem:[#allocation4 + $0x3c0] sm:$0xff]
    %v311 = vld [vmem:[#allocation4 + $0x3c8] sm:$0xff]
    %v312 = vld [vmem:[#allocation4 + $0x3d0] sm:$0xff]
    %v313 = vld [vmem:[#allocation4 + $0x3d8] sm:$0xff]
    %v314 = vld [vmem:[#allocation4 + $0x3e0] sm:$0xff]
    %v315 = vld [vmem:[#allocation4 + $0x3e8] sm:$0xff]
    %v316 = vld [vmem:[#allocation4 + $0x3f0] sm:$0xff]
    %v317 = vld [vmem:[#allocation4 + $0x3f8] sm:$0xff]
    %v318 = vld [vmem:[#allocation4 + $0x400] sm:$0xff]
    %v319 = vld [vmem:[#allocation4 + $0x408] sm:$0xff]
    %v320 = vld [vmem:[#allocation4 + $0x410] sm:$0xff]
    %v321 = vld [vmem:[#allocation4 + $0x418] sm:$0xff]
    %v322 = vld [vmem:[#allocation4 + $0x420] sm:$0xff]
    %v323 = vld [vmem:[#allocation4 + $0x428] sm:$0xff]
    %v324 = vld [vmem:[#allocation4 + $0x430] sm:$0xff]
    %v325 = vld [vmem:[#allocation4 + $0x438] sm:$0xff]
    %v326 = vld [vmem:[#allocation4 + $0x440] sm:$0xff]
    %v327 = vld [vmem:[#allocation4 + $0x448] sm:$0xff]
    %v328 = vld [vmem:[#allocation4 + $0x450] sm:$0xff]
    %v329 = vld [vmem:[#allocation4 + $0x458] sm:$0xff]
    %v330 = vld [vmem:[#allocation4 + $0x460] sm:$0xff]
    %v331 = vld [vmem:[#allocation4 + $0x468] sm:$0xff]
    %v332 = vld [vmem:[#allocation4 + $0x470] sm:$0xff]
    %v333 = vld [vmem:[#allocation4 + $0x478] sm:$0xff]
    %v334 = vld [vmem:[#allocation4 + $0x480] sm:$0xff]
    %v335 = vld [vmem:[#allocation4 + $0x488] sm:$0xff]
    %v336 = vld [vmem:[#allocation4 + $0x490] sm:$0xff]
    %v337 = vld [vmem:[#allocation4 + $0x498] sm:$0xff]
    %v338 = vld [vmem:[#allocation4 + $0x4a0] sm:$0xff]
    %v339 = vld [vmem:[#allocation4 + $0x4a8] sm:$0xff]
    %v340 = vld [vmem:[#allocation4 + $0x4b0] sm:$0xff]
    %v341 = vld [vmem:[#allocation4 + $0x4b8] sm:$0xff]
    %v342 = vld [vmem:[#allocation4 + $0x4c0] sm:$0xff]
    %v343 = vld [vmem:[#allocation4 + $0x4c8] sm:$0xff]
    %v344 = vld [vmem:[#allocation4 + $0x4d0] sm:$0xff]
    %v345 = vld [vmem:[#allocation4 + $0x4d8] sm:$0xff]
    %v346 = vld [vmem:[#allocation4 + $0x4e0] sm:$0xff]
    %v347 = vld [vmem:[#allocation4 + $0x4e8] sm:$0xff]
    %v348 = vld [vmem:[#allocation4 + $0x4f0] sm:$0xff]
    %v349 = vld [vmem:[#allocation4 + $0x4f8] sm:$0xff]
    %v350 = vld [vmem:[#allocation4 + $0x500] sm:$0xff]
    %v351 = vld [vmem:[#allocation4 + $0x508] sm:$0xff]
    %v352 = vld [vmem:[#allocation4 + $0x510] sm:$0xff]
    %v353 = vld [vmem:[#allocation4 + $0x518] sm:$0xff]
    %v354 = vld [vmem:[#allocation4 + $0x520] sm:$0xff]
    %v355 = vld [vmem:[#allocation4 + $0x528] sm:$0xff]
    %v356 = vld [vmem:[#allocation4 + $0x530] sm:$0xff]
    %v357 = vld [vmem:[#allocation4 + $0x538] sm:$0xff]
    %v358 = vld [vmem:[#allocation4 + $0x540] sm:$0xff]
    %v359 = vld [vmem:[#allocation4 + $0x548] sm:$0xff]
    %v360 = vld [vmem:[#allocation4 + $0x550] sm:$0xff]
    %v361 = vld [vmem:[#allocation4 + $0x558] sm:$0xff]
    %v362 = vld [vmem:[#allocation4 + $0x560] sm:$0xff]
    %v363 = vld [vmem:[#allocation4 + $0x568] sm:$0xff]
    %v364 = vld [vmem:[#allocation4 + $0x570] sm:$0xff]
    %v365 = vld [vmem:[#allocation4 + $0x578] sm:$0xff]
    %v366 = vld [vmem:[#allocation4 + $0x580] sm:$0xff]
    %v367 = vld [vmem:[#allocation4 + $0x588] sm:$0xff]
    %v368 = vld [vmem:[#allocation4 + $0x590] sm:$0xff]
    %v369 = vld [vmem:[#allocation4 + $0x598] sm:$0xff]
    %v370 = vld [vmem:[#allocation4 + $0x5a0] sm:$0xff]
    %v371 = vld [vmem:[#allocation4 + $0x5a8] sm:$0xff]
    %v372 = vld [vmem:[#allocation4 + $0x5b0] sm:$0xff]
    %v373 = vld [vmem:[#allocation4 + $0x5b8] sm:$0xff]
    %v374 = vld [vmem:[#allocation4 + $0x5c0] sm:$0xff]
    %v375 = vld [vmem:[#allocation4 + $0x5c8] sm:$0xff]
    %v376 = vld [vmem:[#allocation4 + $0x5d0] sm:$0xff]
    %v377 = vld [vmem:[#allocation4 + $0x5d8] sm:$0xff]
    %v378 = vld [vmem:[#allocation4 + $0x5e0] sm:$0xff]
    %v379 = vld [vmem:[#allocation4 + $0x5e8] sm:$0xff]
    %v380 = vld [vmem:[#allocation4 + $0x5f0] sm:$0xff]
    %v381 = vld [vmem:[#allocation4 + $0x5f8] sm:$0xff]
    %v382 = vld [vmem:[#allocation4 + $0x600] sm:$0xff]
    %v383 = vld [vmem:[#allocation4 + $0x608] sm:$0xff]
    %v384 = vld [vmem:[#allocation4 + $0x610] sm:$0xff]
    %v385 = vld [vmem:[#allocation4 + $0x618] sm:$0xff]
    %v386 = vld [vmem:[#allocation4 + $0x620] sm:$0xff]
    %v387 = vld [vmem:[#allocation4 + $0x628] sm:$0xff]
    %v388 = vld [vmem:[#allocation4 + $0x630] sm:$0xff]
    %v389 = vld [vmem:[#allocation4 + $0x638] sm:$0xff]
    %v390 = vld [vmem:[#allocation4 + $0x640] sm:$0xff]
    %v391 = vld [vmem:[#allocation4 + $0x648] sm:$0xff]
    %v392 = vld [vmem:[#allocation4 + $0x650] sm:$0xff]
    %v393 = vld [vmem:[#allocation4 + $0x658] sm:$0xff]
    %v394 = vld [vmem:[#allocation4 + $0x660] sm:$0xff]
    %v395 = vld [vmem:[#allocation4 + $0x668] sm:$0xff]
    %v396 = vld [vmem:[#allocation4 + $0x670] sm:$0xff]
    %v397 = vld [vmem:[#allocation4 + $0x678] sm:$0xff]
    %v398 = vld [vmem:[#allocation4 + $0x680] sm:$0xff]
    %v399 = vld [vmem:[#allocation4 + $0x688] sm:$0xff]
    %v400 = vld [vmem:[#allocation4 + $0x690] sm:$0xff]
    %v401 = vld [vmem:[#allocation4 + $0x698] sm:$0xff]
    %v402 = vld [vmem:[#allocation4 + $0x6a0] sm:$0xff]
    %v403 = vld [vmem:[#allocation4 + $0x6a8] sm:$0xff]
    %v404 = vld [vmem:[#allocation4 + $0x6b0] sm:$0xff]
    %v405 = vld [vmem:[#allocation4 + $0x6b8] sm:$0xff]
    %v406 = vld [vmem:[#allocation4 + $0x6c0] sm:$0xff]
    %v407 = vld [vmem:[#allocation4 + $0x6c8] sm:$0xff]
    %v408 = vld [vmem:[#allocation4 + $0x6d0] sm:$0xff]
    %v409 = vld [vmem:[#allocation4 + $0x6d8] sm:$0xff]
    %v410 = vld [vmem:[#allocation4 + $0x6e0] sm:$0xff]
    %v411 = vld [vmem:[#allocation4 + $0x6e8] sm:$0xff]
    %v412 = vld [vmem:[#allocation4 + $0x6f0] sm:$0xff]
    %v413 = vld [vmem:[#allocation4 + $0x6f8] sm:$0xff]
    %v414 = vld [vmem:[#allocation4 + $0x700] sm:$0xff]
    %v415 = vld [vmem:[#allocation4 + $0x708] sm:$0xff]
    %v416 = vld [vmem:[#allocation4 + $0x710] sm:$0xff]
    %v417 = vld [vmem:[#allocation4 + $0x718] sm:$0xff]
    %v418 = vld [vmem:[#allocation4 + $0x720] sm:$0xff]
    %v419 = vld [vmem:[#allocation4 + $0x728] sm:$0xff]
    %v420 = vld [vmem:[#allocation4 + $0x730] sm:$0xff]
    %v421 = vld [vmem:[#allocation4 + $0x738] sm:$0xff]
    %v422 = vld [vmem:[#allocation4 + $0x740] sm:$0xff]
    %v423 = vld [vmem:[#allocation4 + $0x748] sm:$0xff]
    %v424 = vld [vmem:[#allocation4 + $0x750] sm:$0xff]
    %v425 = vld [vmem:[#allocation4 + $0x758] sm:$0xff]
    %v426 = vld [vmem:[#allocation4 + $0x760] sm:$0xff]
    %v427 = vld [vmem:[#allocation4 + $0x768] sm:$0xff]
    %v428 = vld [vmem:[#allocation4 + $0x770] sm:$0xff]
    %v429 = vld [vmem:[#allocation4 + $0x778] sm:$0xff]
    %v430 = vld [vmem:[#allocation4 + $0x780] sm:$0xff]
    %v431 = vld [vmem:[#allocation4 + $0x788] sm:$0xff]
    %v432 = vld [vmem:[#allocation4 + $0x790] sm:$0xff]
    %v433 = vld [vmem:[#allocation4 + $0x798] sm:$0xff]
    %v434 = vld [vmem:[#allocation4 + $0x7a0] sm:$0xff]
    %v435 = vld [vmem:[#allocation4 + $0x7a8] sm:$0xff]
    %v436 = vld [vmem:[#allocation4 + $0x7b0] sm:$0xff]
    %v437 = vld [vmem:[#allocation4 + $0x7b8] sm:$0xff]
    %v438 = vld [vmem:[#allocation4 + $0x7c0] sm:$0xff]
    %v439 = vld [vmem:[#allocation4 + $0x7c8] sm:$0xff]
    %v440 = vld [vmem:[#allocation4 + $0x7d0] sm:$0xff]
    %v441 = vld [vmem:[#allocation4 + $0x7d8] sm:$0xff]
    %v442 = vld [vmem:[#allocation4 + $0x7e0] sm:$0xff]
    %v443 = vld [vmem:[#allocation4 + $0x7e8] sm:$0xff]
    %v444 = vld [vmem:[#allocation4 + $0x7f0] sm:$0xff]
    %v445 = vld [vmem:[#allocation4 + $0x7f8] sm:$0xff]
    %v446 = vld [vmem:[%s2] sm:$0x3]
    %v448 = vlaneseq
    %v449 = vshrl.u32 %v448, 7
    %v450 = vsub.s32 0, %v449
    %v451 = vrot.slane %v446, %v450
    %v452 = vlaneseq
    %v453 = vshrl.u32 %v452, 7
    %v454 = vsub.s32 1, %v453
    %v455 = vrot.slane %v446, %v454
    %v714 = vunpack.c.l.b16 %v190
    %v715 = vunpack.c.h.b16 %v190
    %v716 = vunpack.c.l.b16 %v191
    %v717 = vunpack.c.h.b16 %v191
    %v718 = vunpack.c.l.b16 %v192
    %v719 = vunpack.c.h.b16 %v192
    %v720 = vunpack.c.l.b16 %v193
    %v721 = vunpack.c.h.b16 %v193
    %v722 = vunpack.c.l.b16 %v194
    %v723 = vunpack.c.h.b16 %v194
    %v724 = vunpack.c.l.b16 %v195
    %v725 = vunpack.c.h.b16 %v195
    %v726 = vunpack.c.l.b16 %v196
    %v727 = vunpack.c.h.b16 %v196
    %v728 = vunpack.c.l.b16 %v197
    %v729 = vunpack.c.h.b16 %v197
    %v730 = vunpack.c.l.b16 %v198
    %v731 = vunpack.c.h.b16 %v198
    %v732 = vunpack.c.l.b16 %v199
    %v733 = vunpack.c.h.b16 %v199
    %v734 = vunpack.c.l.b16 %v200
    %v735 = vunpack.c.h.b16 %v200
    %v736 = vunpack.c.l.b16 %v201
    %v737 = vunpack.c.h.b16 %v201
    %v738 = vunpack.c.l.b16 %v202
    %v739 = vunpack.c.h.b16 %v202
    %v740 = vunpack.c.l.b16 %v203
    %v741 = vunpack.c.h.b16 %v203
    %v742 = vunpack.c.l.b16 %v204
    %v743 = vunpack.c.h.b16 %v204
    %v744 = vunpack.c.l.b16 %v205
    %v745 = vunpack.c.h.b16 %v205
    %v746 = vunpack.c.l.b16 %v206
    %v747 = vunpack.c.h.b16 %v206
    %v748 = vunpack.c.l.b16 %v207
    %v749 = vunpack.c.h.b16 %v207
    %v750 = vunpack.c.l.b16 %v208
    %v751 = vunpack.c.h.b16 %v208
    %v752 = vunpack.c.l.b16 %v209
    %v753 = vunpack.c.h.b16 %v209
    %v754 = vunpack.c.l.b16 %v210
    %v755 = vunpack.c.h.b16 %v210
    %v756 = vunpack.c.l.b16 %v211
    %v757 = vunpack.c.h.b16 %v211
    %v758 = vunpack.c.l.b16 %v212
    %v759 = vunpack.c.h.b16 %v212
    %v760 = vunpack.c.l.b16 %v213
    %v761 = vunpack.c.h.b16 %v213
    %v762 = vunpack.c.l.b16 %v214
    %v763 = vunpack.c.h.b16 %v214
    %v764 = vunpack.c.l.b16 %v215
    %v765 = vunpack.c.h.b16 %v215
    %v766 = vunpack.c.l.b16 %v216
    %v767 = vunpack.c.h.b16 %v216
    %v768 = vunpack.c.l.b16 %v217
    %v769 = vunpack.c.h.b16 %v217
    %v770 = vunpack.c.l.b16 %v218
    %v771 = vunpack.c.h.b16 %v218
    %v772 = vunpack.c.l.b16 %v219
    %v773 = vunpack.c.h.b16 %v219
    %v774 = vunpack.c.l.b16 %v220
    %v775 = vunpack.c.h.b16 %v220
    %v776 = vunpack.c.l.b16 %v221
    %v777 = vunpack.c.h.b16 %v221
    %v778 = vunpack.c.l.b16 %v222
    %v779 = vunpack.c.h.b16 %v222
    %v780 = vunpack.c.l.b16 %v223
    %v781 = vunpack.c.h.b16 %v223
    %v782 = vunpack.c.l.b16 %v224
    %v783 = vunpack.c.h.b16 %v224
    %v784 = vunpack.c.l.b16 %v225
    %v785 = vunpack.c.h.b16 %v225
    %v786 = vunpack.c.l.b16 %v226
    %v787 = vunpack.c.h.b16 %v226
    %v788 = vunpack.c.l.b16 %v227
    %v789 = vunpack.c.h.b16 %v227
    %v790 = vunpack.c.l.b16 %v228
    %v791 = vunpack.c.h.b16 %v228
    %v792 = vunpack.c.l.b16 %v229
    %v793 = vunpack.c.h.b16 %v229
    %v794 = vunpack.c.l.b16 %v230
    %v795 = vunpack.c.h.b16 %v230
    %v796 = vunpack.c.l.b16 %v231
    %v797 = vunpack.c.h.b16 %v231
    %v798 = vunpack.c.l.b16 %v232
    %v799 = vunpack.c.h.b16 %v232
    %v800 = vunpack.c.l.b16 %v233
    %v801 = vunpack.c.h.b16 %v233
    %v802 = vunpack.c.l.b16 %v234
    %v803 = vunpack.c.h.b16 %v234
    %v804 = vunpack.c.l.b16 %v235
    %v805 = vunpack.c.h.b16 %v235
    %v806 = vunpack.c.l.b16 %v236
    %v807 = vunpack.c.h.b16 %v236
    %v808 = vunpack.c.l.b16 %v237
    %v809 = vunpack.c.h.b16 %v237
    %v810 = vunpack.c.l.b16 %v238
    %v811 = vunpack.c.h.b16 %v238
    %v812 = vunpack.c.l.b16 %v239
    %v813 = vunpack.c.h.b16 %v239
    %v814 = vunpack.c.l.b16 %v240
    %v815 = vunpack.c.h.b16 %v240
    %v816 = vunpack.c.l.b16 %v241
    %v817 = vunpack.c.h.b16 %v241
    %v818 = vunpack.c.l.b16 %v242
    %v819 = vunpack.c.h.b16 %v242
    %v820 = vunpack.c.l.b16 %v243
    %v821 = vunpack.c.h.b16 %v243
    %v822 = vunpack.c.l.b16 %v244
    %v823 = vunpack.c.h.b16 %v244
    %v824 = vunpack.c.l.b16 %v245
    %v825 = vunpack.c.h.b16 %v245
    %v826 = vunpack.c.l.b16 %v246
    %v827 = vunpack.c.h.b16 %v246
    %v828 = vunpack.c.l.b16 %v247
    %v829 = vunpack.c.h.b16 %v247
    %v830 = vunpack.c.l.b16 %v248
    %v831 = vunpack.c.h.b16 %v248
    %v832 = vunpack.c.l.b16 %v249
    %v833 = vunpack.c.h.b16 %v249
    %v834 = vunpack.c.l.b16 %v250
    %v835 = vunpack.c.h.b16 %v250
    %v836 = vunpack.c.l.b16 %v251
    %v837 = vunpack.c.h.b16 %v251
    %v838 = vunpack.c.l.b16 %v252
    %v839 = vunpack.c.h.b16 %v252
    %v840 = vunpack.c.l.b16 %v253
    %v841 = vunpack.c.h.b16 %v253
    %v842 = vunpack.c.l.b16 %v254
    %v843 = vunpack.c.h.b16 %v254
    %v844 = vunpack.c.l.b16 %v255
    %v845 = vunpack.c.h.b16 %v255
    %v846 = vunpack.c.l.b16 %v256
    %v847 = vunpack.c.h.b16 %v256
    %v848 = vunpack.c.l.b16 %v257
    %v849 = vunpack.c.h.b16 %v257
    %v850 = vunpack.c.l.b16 %v258
    %v851 = vunpack.c.h.b16 %v258
    %v852 = vunpack.c.l.b16 %v259
    %v853 = vunpack.c.h.b16 %v259
    %v854 = vunpack.c.l.b16 %v260
    %v855 = vunpack.c.h.b16 %v260
    %v856 = vunpack.c.l.b16 %v261
    %v857 = vunpack.c.h.b16 %v261
    %v858 = vunpack.c.l.b16 %v262
    %v859 = vunpack.c.h.b16 %v262
    %v860 = vunpack.c.l.b16 %v263
    %v861 = vunpack.c.h.b16 %v263
    %v862 = vunpack.c.l.b16 %v264
    %v863 = vunpack.c.h.b16 %v264
    %v864 = vunpack.c.l.b16 %v265
    %v865 = vunpack.c.h.b16 %v265
    %v866 = vunpack.c.l.b16 %v266
    %v867 = vunpack.c.h.b16 %v266
    %v868 = vunpack.c.l.b16 %v267
    %v869 = vunpack.c.h.b16 %v267
    %v870 = vunpack.c.l.b16 %v268
    %v871 = vunpack.c.h.b16 %v268
    %v872 = vunpack.c.l.b16 %v269
    %v873 = vunpack.c.h.b16 %v269
    %v874 = vunpack.c.l.b16 %v270
    %v875 = vunpack.c.h.b16 %v270
    %v876 = vunpack.c.l.b16 %v271
    %v877 = vunpack.c.h.b16 %v271
    %v878 = vunpack.c.l.b16 %v272
    %v879 = vunpack.c.h.b16 %v272
    %v880 = vunpack.c.l.b16 %v273
    %v881 = vunpack.c.h.b16 %v273
    %v882 = vunpack.c.l.b16 %v274
    %v883 = vunpack.c.h.b16 %v274
    %v884 = vunpack.c.l.b16 %v275
    %v885 = vunpack.c.h.b16 %v275
    %v886 = vunpack.c.l.b16 %v276
    %v887 = vunpack.c.h.b16 %v276
    %v888 = vunpack.c.l.b16 %v277
    %v889 = vunpack.c.h.b16 %v277
    %v890 = vunpack.c.l.b16 %v278
    %v891 = vunpack.c.h.b16 %v278
    %v892 = vunpack.c.l.b16 %v279
    %v893 = vunpack.c.h.b16 %v279
    %v894 = vunpack.c.l.b16 %v280
    %v895 = vunpack.c.h.b16 %v280
    %v896 = vunpack.c.l.b16 %v281
    %v897 = vunpack.c.h.b16 %v281
    %v898 = vunpack.c.l.b16 %v282
    %v899 = vunpack.c.h.b16 %v282
    %v900 = vunpack.c.l.b16 %v283
    %v901 = vunpack.c.h.b16 %v283
    %v902 = vunpack.c.l.b16 %v284
    %v903 = vunpack.c.h.b16 %v284
    %v904 = vunpack.c.l.b16 %v285
    %v905 = vunpack.c.h.b16 %v285
    %v906 = vunpack.c.l.b16 %v286
    %v907 = vunpack.c.h.b16 %v286
    %v908 = vunpack.c.l.b16 %v287
    %v909 = vunpack.c.h.b16 %v287
    %v910 = vunpack.c.l.b16 %v288
    %v911 = vunpack.c.h.b16 %v288
    %v912 = vunpack.c.l.b16 %v289
    %v913 = vunpack.c.h.b16 %v289
    %v914 = vunpack.c.l.b16 %v290
    %v915 = vunpack.c.h.b16 %v290
    %v916 = vunpack.c.l.b16 %v291
    %v917 = vunpack.c.h.b16 %v291
    %v918 = vunpack.c.l.b16 %v292
    %v919 = vunpack.c.h.b16 %v292
    %v920 = vunpack.c.l.b16 %v293
    %v921 = vunpack.c.h.b16 %v293
    %v922 = vunpack.c.l.b16 %v294
    %v923 = vunpack.c.h.b16 %v294
    %v924 = vunpack.c.l.b16 %v295
    %v925 = vunpack.c.h.b16 %v295
    %v926 = vunpack.c.l.b16 %v296
    %v927 = vunpack.c.h.b16 %v296
    %v928 = vunpack.c.l.b16 %v297
    %v929 = vunpack.c.h.b16 %v297
    %v930 = vunpack.c.l.b16 %v298
    %v931 = vunpack.c.h.b16 %v298
    %v932 = vunpack.c.l.b16 %v299
    %v933 = vunpack.c.h.b16 %v299
    %v934 = vunpack.c.l.b16 %v300
    %v935 = vunpack.c.h.b16 %v300
    %v936 = vunpack.c.l.b16 %v301
    %v937 = vunpack.c.h.b16 %v301
    %v938 = vunpack.c.l.b16 %v302
    %v939 = vunpack.c.h.b16 %v302
    %v940 = vunpack.c.l.b16 %v303
    %v941 = vunpack.c.h.b16 %v303
    %v942 = vunpack.c.l.b16 %v304
    %v943 = vunpack.c.h.b16 %v304
    %v944 = vunpack.c.l.b16 %v305
    %v945 = vunpack.c.h.b16 %v305
    %v946 = vunpack.c.l.b16 %v306
    %v947 = vunpack.c.h.b16 %v306
    %v948 = vunpack.c.l.b16 %v307
    %v949 = vunpack.c.h.b16 %v307
    %v950 = vunpack.c.l.b16 %v308
    %v951 = vunpack.c.h.b16 %v308
    %v952 = vunpack.c.l.b16 %v309
    %v953 = vunpack.c.h.b16 %v309
    %v954 = vunpack.c.l.b16 %v310
    %v955 = vunpack.c.h.b16 %v310
    %v956 = vunpack.c.l.b16 %v311
    %v957 = vunpack.c.h.b16 %v311
    %v958 = vunpack.c.l.b16 %v312
    %v959 = vunpack.c.h.b16 %v312
    %v960 = vunpack.c.l.b16 %v313
    %v961 = vunpack.c.h.b16 %v313
    %v962 = vunpack.c.l.b16 %v314
    %v963 = vunpack.c.h.b16 %v314
    %v964 = vunpack.c.l.b16 %v315
    %v965 = vunpack.c.h.b16 %v315
    %v966 = vunpack.c.l.b16 %v316
    %v967 = vunpack.c.h.b16 %v316
    %v968 = vunpack.c.l.b16 %v317
    %v969 = vunpack.c.h.b16 %v317
    %v970 = vunpack.c.l.b16 %v318
    %v971 = vunpack.c.h.b16 %v318
    %v972 = vunpack.c.l.b16 %v319
    %v973 = vunpack.c.h.b16 %v319
    %v974 = vunpack.c.l.b16 %v320
    %v975 = vunpack.c.h.b16 %v320
    %v976 = vunpack.c.l.b16 %v321
    %v977 = vunpack.c.h.b16 %v321
    %v978 = vunpack.c.l.b16 %v322
    %v979 = vunpack.c.h.b16 %v322
    %v980 = vunpack.c.l.b16 %v323
    %v981 = vunpack.c.h.b16 %v323
    %v982 = vunpack.c.l.b16 %v324
    %v983 = vunpack.c.h.b16 %v324
    %v984 = vunpack.c.l.b16 %v325
    %v985 = vunpack.c.h.b16 %v325
    %v986 = vunpack.c.l.b16 %v326
    %v987 = vunpack.c.h.b16 %v326
    %v988 = vunpack.c.l.b16 %v327
    %v989 = vunpack.c.h.b16 %v327
    %v990 = vunpack.c.l.b16 %v328
    %v991 = vunpack.c.h.b16 %v328
    %v992 = vunpack.c.l.b16 %v329
    %v993 = vunpack.c.h.b16 %v329
    %v994 = vunpack.c.l.b16 %v330
    %v995 = vunpack.c.h.b16 %v330
    %v996 = vunpack.c.l.b16 %v331
    %v997 = vunpack.c.h.b16 %v331
    %v998 = vunpack.c.l.b16 %v332
    %v999 = vunpack.c.h.b16 %v332
    %v1000 = vunpack.c.l.b16 %v333
    %v1001 = vunpack.c.h.b16 %v333
    %v1002 = vunpack.c.l.b16 %v334
    %v1003 = vunpack.c.h.b16 %v334
    %v1004 = vunpack.c.l.b16 %v335
    %v1005 = vunpack.c.h.b16 %v335
    %v1006 = vunpack.c.l.b16 %v336
    %v1007 = vunpack.c.h.b16 %v336
    %v1008 = vunpack.c.l.b16 %v337
    %v1009 = vunpack.c.h.b16 %v337
    %v1010 = vunpack.c.l.b16 %v338
    %v1011 = vunpack.c.h.b16 %v338
    %v1012 = vunpack.c.l.b16 %v339
    %v1013 = vunpack.c.h.b16 %v339
    %v1014 = vunpack.c.l.b16 %v340
    %v1015 = vunpack.c.h.b16 %v340
    %v1016 = vunpack.c.l.b16 %v341
    %v1017 = vunpack.c.h.b16 %v341
    %v1018 = vunpack.c.l.b16 %v342
    %v1019 = vunpack.c.h.b16 %v342
    %v1020 = vunpack.c.l.b16 %v343
    %v1021 = vunpack.c.h.b16 %v343
    %v1022 = vunpack.c.l.b16 %v344
    %v1023 = vunpack.c.h.b16 %v344
    %v1024 = vunpack.c.l.b16 %v345
    %v1025 = vunpack.c.h.b16 %v345
    %v1026 = vunpack.c.l.b16 %v346
    %v1027 = vunpack.c.h.b16 %v346
    %v1028 = vunpack.c.l.b16 %v347
    %v1029 = vunpack.c.h.b16 %v347
    %v1030 = vunpack.c.l.b16 %v348
    %v1031 = vunpack.c.h.b16 %v348
    %v1032 = vunpack.c.l.b16 %v349
    %v1033 = vunpack.c.h.b16 %v349
    %v1034 = vunpack.c.l.b16 %v350
    %v1035 = vunpack.c.h.b16 %v350
    %v1036 = vunpack.c.l.b16 %v351
    %v1037 = vunpack.c.h.b16 %v351
    %v1038 = vunpack.c.l.b16 %v352
    %v1039 = vunpack.c.h.b16 %v352
    %v1040 = vunpack.c.l.b16 %v353
    %v1041 = vunpack.c.h.b16 %v353
    %v1042 = vunpack.c.l.b16 %v354
    %v1043 = vunpack.c.h.b16 %v354
    %v1044 = vunpack.c.l.b16 %v355
    %v1045 = vunpack.c.h.b16 %v355
    %v1046 = vunpack.c.l.b16 %v356
    %v1047 = vunpack.c.h.b16 %v356
    %v1048 = vunpack.c.l.b16 %v357
    %v1049 = vunpack.c.h.b16 %v357
    %v1050 = vunpack.c.l.b16 %v358
    %v1051 = vunpack.c.h.b16 %v358
    %v1052 = vunpack.c.l.b16 %v359
    %v1053 = vunpack.c.h.b16 %v359
    %v1054 = vunpack.c.l.b16 %v360
    %v1055 = vunpack.c.h.b16 %v360
    %v1056 = vunpack.c.l.b16 %v361
    %v1057 = vunpack.c.h.b16 %v361
    %v1058 = vunpack.c.l.b16 %v362
    %v1059 = vunpack.c.h.b16 %v362
    %v1060 = vunpack.c.l.b16 %v363
    %v1061 = vunpack.c.h.b16 %v363
    %v1062 = vunpack.c.l.b16 %v364
    %v1063 = vunpack.c.h.b16 %v364
    %v1064 = vunpack.c.l.b16 %v365
    %v1065 = vunpack.c.h.b16 %v365
    %v1066 = vunpack.c.l.b16 %v366
    %v1067 = vunpack.c.h.b16 %v366
    %v1068 = vunpack.c.l.b16 %v367
    %v1069 = vunpack.c.h.b16 %v367
    %v1070 = vunpack.c.l.b16 %v368
    %v1071 = vunpack.c.h.b16 %v368
    %v1072 = vunpack.c.l.b16 %v369
    %v1073 = vunpack.c.h.b16 %v369
    %v1074 = vunpack.c.l.b16 %v370
    %v1075 = vunpack.c.h.b16 %v370
    %v1076 = vunpack.c.l.b16 %v371
    %v1077 = vunpack.c.h.b16 %v371
    %v1078 = vunpack.c.l.b16 %v372
    %v1079 = vunpack.c.h.b16 %v372
    %v1080 = vunpack.c.l.b16 %v373
    %v1081 = vunpack.c.h.b16 %v373
    %v1082 = vunpack.c.l.b16 %v374
    %v1083 = vunpack.c.h.b16 %v374
    %v1084 = vunpack.c.l.b16 %v375
    %v1085 = vunpack.c.h.b16 %v375
    %v1086 = vunpack.c.l.b16 %v376
    %v1087 = vunpack.c.h.b16 %v376
    %v1088 = vunpack.c.l.b16 %v377
    %v1089 = vunpack.c.h.b16 %v377
    %v1090 = vunpack.c.l.b16 %v378
    %v1091 = vunpack.c.h.b16 %v378
    %v1092 = vunpack.c.l.b16 %v379
    %v1093 = vunpack.c.h.b16 %v379
    %v1094 = vunpack.c.l.b16 %v380
    %v1095 = vunpack.c.h.b16 %v380
    %v1096 = vunpack.c.l.b16 %v381
    %v1097 = vunpack.c.h.b16 %v381
    %v1098 = vunpack.c.l.b16 %v382
    %v1099 = vunpack.c.h.b16 %v382
    %v1100 = vunpack.c.l.b16 %v383
    %v1101 = vunpack.c.h.b16 %v383
    %v1102 = vunpack.c.l.b16 %v384
    %v1103 = vunpack.c.h.b16 %v384
    %v1104 = vunpack.c.l.b16 %v385
    %v1105 = vunpack.c.h.b16 %v385
    %v1106 = vunpack.c.l.b16 %v386
    %v1107 = vunpack.c.h.b16 %v386
    %v1108 = vunpack.c.l.b16 %v387
    %v1109 = vunpack.c.h.b16 %v387
    %v1110 = vunpack.c.l.b16 %v388
    %v1111 = vunpack.c.h.b16 %v388
    %v1112 = vunpack.c.l.b16 %v389
    %v1113 = vunpack.c.h.b16 %v389
    %v1114 = vunpack.c.l.b16 %v390
    %v1115 = vunpack.c.h.b16 %v390
    %v1116 = vunpack.c.l.b16 %v391
    %v1117 = vunpack.c.h.b16 %v391
    %v1118 = vunpack.c.l.b16 %v392
    %v1119 = vunpack.c.h.b16 %v392
    %v1120 = vunpack.c.l.b16 %v393
    %v1121 = vunpack.c.h.b16 %v393
    %v1122 = vunpack.c.l.b16 %v394
    %v1123 = vunpack.c.h.b16 %v394
    %v1124 = vunpack.c.l.b16 %v395
    %v1125 = vunpack.c.h.b16 %v395
    %v1126 = vunpack.c.l.b16 %v396
    %v1127 = vunpack.c.h.b16 %v396
    %v1128 = vunpack.c.l.b16 %v397
    %v1129 = vunpack.c.h.b16 %v397
    %v1130 = vunpack.c.l.b16 %v398
    %v1131 = vunpack.c.h.b16 %v398
    %v1132 = vunpack.c.l.b16 %v399
    %v1133 = vunpack.c.h.b16 %v399
    %v1134 = vunpack.c.l.b16 %v400
    %v1135 = vunpack.c.h.b16 %v400
    %v1136 = vunpack.c.l.b16 %v401
    %v1137 = vunpack.c.h.b16 %v401
    %v1138 = vunpack.c.l.b16 %v402
    %v1139 = vunpack.c.h.b16 %v402
    %v1140 = vunpack.c.l.b16 %v403
    %v1141 = vunpack.c.h.b16 %v403
    %v1142 = vunpack.c.l.b16 %v404
    %v1143 = vunpack.c.h.b16 %v404
    %v1144 = vunpack.c.l.b16 %v405
    %v1145 = vunpack.c.h.b16 %v405
    %v1146 = vunpack.c.l.b16 %v406
    %v1147 = vunpack.c.h.b16 %v406
    %v1148 = vunpack.c.l.b16 %v407
    %v1149 = vunpack.c.h.b16 %v407
    %v1150 = vunpack.c.l.b16 %v408
    %v1151 = vunpack.c.h.b16 %v408
    %v1152 = vunpack.c.l.b16 %v409
    %v1153 = vunpack.c.h.b16 %v409
    %v1154 = vunpack.c.l.b16 %v410
    %v1155 = vunpack.c.h.b16 %v410
    %v1156 = vunpack.c.l.b16 %v411
    %v1157 = vunpack.c.h.b16 %v411
    %v1158 = vunpack.c.l.b16 %v412
    %v1159 = vunpack.c.h.b16 %v412
    %v1160 = vunpack.c.l.b16 %v413
    %v1161 = vunpack.c.h.b16 %v413
    %v1162 = vunpack.c.l.b16 %v414
    %v1163 = vunpack.c.h.b16 %v414
    %v1164 = vunpack.c.l.b16 %v415
    %v1165 = vunpack.c.h.b16 %v415
    %v1166 = vunpack.c.l.b16 %v416
    %v1167 = vunpack.c.h.b16 %v416
    %v1168 = vunpack.c.l.b16 %v417
    %v1169 = vunpack.c.h.b16 %v417
    %v1170 = vunpack.c.l.b16 %v418
    %v1171 = vunpack.c.h.b16 %v418
    %v1172 = vunpack.c.l.b16 %v419
    %v1173 = vunpack.c.h.b16 %v419
    %v1174 = vunpack.c.l.b16 %v420
    %v1175 = vunpack.c.h.b16 %v420
    %v1176 = vunpack.c.l.b16 %v421
    %v1177 = vunpack.c.h.b16 %v421
    %v1178 = vunpack.c.l.b16 %v422
    %v1179 = vunpack.c.h.b16 %v422
    %v1180 = vunpack.c.l.b16 %v423
    %v1181 = vunpack.c.h.b16 %v423
    %v1182 = vunpack.c.l.b16 %v424
    %v1183 = vunpack.c.h.b16 %v424
    %v1184 = vunpack.c.l.b16 %v425
    %v1185 = vunpack.c.h.b16 %v425
    %v1186 = vunpack.c.l.b16 %v426
    %v1187 = vunpack.c.h.b16 %v426
    %v1188 = vunpack.c.l.b16 %v427
    %v1189 = vunpack.c.h.b16 %v427
    %v1190 = vunpack.c.l.b16 %v428
    %v1191 = vunpack.c.h.b16 %v428
    %v1192 = vunpack.c.l.b16 %v429
    %v1193 = vunpack.c.h.b16 %v429
    %v1194 = vunpack.c.l.b16 %v430
    %v1195 = vunpack.c.h.b16 %v430
    %v1196 = vunpack.c.l.b16 %v431
    %v1197 = vunpack.c.h.b16 %v431
    %v1198 = vunpack.c.l.b16 %v432
    %v1199 = vunpack.c.h.b16 %v432
    %v1200 = vunpack.c.l.b16 %v433
    %v1201 = vunpack.c.h.b16 %v433
    %v1202 = vunpack.c.l.b16 %v434
    %v1203 = vunpack.c.h.b16 %v434
    %v1204 = vunpack.c.l.b16 %v435
    %v1205 = vunpack.c.h.b16 %v435
    %v1206 = vunpack.c.l.b16 %v436
    %v1207 = vunpack.c.h.b16 %v436
    %v1208 = vunpack.c.l.b16 %v437
    %v1209 = vunpack.c.h.b16 %v437
    %v1210 = vunpack.c.l.b16 %v438
    %v1211 = vunpack.c.h.b16 %v438
    %v1212 = vunpack.c.l.b16 %v439
    %v1213 = vunpack.c.h.b16 %v439
    %v1214 = vunpack.c.l.b16 %v440
    %v1215 = vunpack.c.h.b16 %v440
    %v1216 = vunpack.c.l.b16 %v441
    %v1217 = vunpack.c.h.b16 %v441
    %v1218 = vunpack.c.l.b16 %v442
    %v1219 = vunpack.c.h.b16 %v442
    %v1220 = vunpack.c.l.b16 %v443
    %v1221 = vunpack.c.h.b16 %v443
    %v1222 = vunpack.c.l.b16 %v444
    %v1223 = vunpack.c.h.b16 %v444
    %v1224 = vunpack.c.l.b16 %v445
    %v1225 = vunpack.c.h.b16 %v445
    %v1226 = vpack.c.b16 %v716, %v714
    %v1227 = vpack.c.b16 %v717, %v715
    %v1228 = vpack.c.b16 %v720, %v718
    %v1229 = vpack.c.b16 %v721, %v719
    %v1230 = vpack.c.b16 %v724, %v722
    %v1231 = vpack.c.b16 %v725, %v723
    %v1232 = vpack.c.b16 %v728, %v726
    %v1233 = vpack.c.b16 %v729, %v727
    %v1234 = vpack.c.b16 %v732, %v730
    %v1235 = vpack.c.b16 %v733, %v731
    %v1236 = vpack.c.b16 %v736, %v734
    %v1237 = vpack.c.b16 %v737, %v735
    %v1238 = vpack.c.b16 %v740, %v738
    %v1239 = vpack.c.b16 %v741, %v739
    %v1240 = vpack.c.b16 %v744, %v742
    %v1241 = vpack.c.b16 %v745, %v743
    %v1242 = vpack.c.b16 %v748, %v746
    %v1243 = vpack.c.b16 %v749, %v747
    %v1244 = vpack.c.b16 %v752, %v750
    %v1245 = vpack.c.b16 %v753, %v751
    %v1246 = vpack.c.b16 %v756, %v754
    %v1247 = vpack.c.b16 %v757, %v755
    %v1248 = vpack.c.b16 %v760, %v758
    %v1249 = vpack.c.b16 %v761, %v759
    %v1250 = vpack.c.b16 %v764, %v762
    %v1251 = vpack.c.b16 %v765, %v763
    %v1252 = vpack.c.b16 %v768, %v766
    %v1253 = vpack.c.b16 %v769, %v767
    %v1254 = vpack.c.b16 %v772, %v770
    %v1255 = vpack.c.b16 %v773, %v771
    %v1256 = vpack.c.b16 %v776, %v774
    %v1257 = vpack.c.b16 %v777, %v775
    %v1258 = vpack.c.b16 %v780, %v778
    %v1259 = vpack.c.b16 %v781, %v779
    %v1260 = vpack.c.b16 %v784, %v782
    %v1261 = vpack.c.b16 %v785, %v783
    %v1262 = vpack.c.b16 %v788, %v786
    %v1263 = vpack.c.b16 %v789, %v787
    %v1264 = vpack.c.b16 %v792, %v790
    %v1265 = vpack.c.b16 %v793, %v791
    %v1266 = vpack.c.b16 %v796, %v794
    %v1267 = vpack.c.b16 %v797, %v795
    %v1268 = vpack.c.b16 %v800, %v798
    %v1269 = vpack.c.b16 %v801, %v799
    %v1270 = vpack.c.b16 %v804, %v802
    %v1271 = vpack.c.b16 %v805, %v803
    %v1272 = vpack.c.b16 %v808, %v806
    %v1273 = vpack.c.b16 %v809, %v807
    %v1274 = vpack.c.b16 %v812, %v810
    %v1275 = vpack.c.b16 %v813, %v811
    %v1276 = vpack.c.b16 %v816, %v814
    %v1277 = vpack.c.b16 %v817, %v815
    %v1278 = vpack.c.b16 %v820, %v818
    %v1279 = vpack.c.b16 %v821, %v819
    %v1280 = vpack.c.b16 %v824, %v822
    %v1281 = vpack.c.b16 %v825, %v823
    %v1282 = vpack.c.b16 %v828, %v826
    %v1283 = vpack.c.b16 %v829, %v827
    %v1284 = vpack.c.b16 %v832, %v830
    %v1285 = vpack.c.b16 %v833, %v831
    %v1286 = vpack.c.b16 %v836, %v834
    %v1287 = vpack.c.b16 %v837, %v835
    %v1288 = vpack.c.b16 %v840, %v838
    %v1289 = vpack.c.b16 %v841, %v839
    %v1290 = vpack.c.b16 %v844, %v842
    %v1291 = vpack.c.b16 %v845, %v843
    %v1292 = vpack.c.b16 %v848, %v846
    %v1293 = vpack.c.b16 %v849, %v847
    %v1294 = vpack.c.b16 %v852, %v850
    %v1295 = vpack.c.b16 %v853, %v851
    %v1296 = vpack.c.b16 %v856, %v854
    %v1297 = vpack.c.b16 %v857, %v855
    %v1298 = vpack.c.b16 %v860, %v858
    %v1299 = vpack.c.b16 %v861, %v859
    %v1300 = vpack.c.b16 %v864, %v862
    %v1301 = vpack.c.b16 %v865, %v863
    %v1302 = vpack.c.b16 %v868, %v866
    %v1303 = vpack.c.b16 %v869, %v867
    %v1304 = vpack.c.b16 %v872, %v870
    %v1305 = vpack.c.b16 %v873, %v871
    %v1306 = vpack.c.b16 %v876, %v874
    %v1307 = vpack.c.b16 %v877, %v875
    %v1308 = vpack.c.b16 %v880, %v878
    %v1309 = vpack.c.b16 %v881, %v879
    %v1310 = vpack.c.b16 %v884, %v882
    %v1311 = vpack.c.b16 %v885, %v883
    %v1312 = vpack.c.b16 %v888, %v886
    %v1313 = vpack.c.b16 %v889, %v887
    %v1314 = vpack.c.b16 %v892, %v890
    %v1315 = vpack.c.b16 %v893, %v891
    %v1316 = vpack.c.b16 %v896, %v894
    %v1317 = vpack.c.b16 %v897, %v895
    %v1318 = vpack.c.b16 %v900, %v898
    %v1319 = vpack.c.b16 %v901, %v899
    %v1320 = vpack.c.b16 %v904, %v902
    %v1321 = vpack.c.b16 %v905, %v903
    %v1322 = vpack.c.b16 %v908, %v906
    %v1323 = vpack.c.b16 %v909, %v907
    %v1324 = vpack.c.b16 %v912, %v910
    %v1325 = vpack.c.b16 %v913, %v911
    %v1326 = vpack.c.b16 %v916, %v914
    %v1327 = vpack.c.b16 %v917, %v915
    %v1328 = vpack.c.b16 %v920, %v918
    %v1329 = vpack.c.b16 %v921, %v919
    %v1330 = vpack.c.b16 %v924, %v922
    %v1331 = vpack.c.b16 %v925, %v923
    %v1332 = vpack.c.b16 %v928, %v926
    %v1333 = vpack.c.b16 %v929, %v927
    %v1334 = vpack.c.b16 %v932, %v930
    %v1335 = vpack.c.b16 %v933, %v931
    %v1336 = vpack.c.b16 %v936, %v934
    %v1337 = vpack.c.b16 %v937, %v935
    %v1338 = vpack.c.b16 %v940, %v938
    %v1339 = vpack.c.b16 %v941, %v939
    %v1340 = vpack.c.b16 %v944, %v942
    %v1341 = vpack.c.b16 %v945, %v943
    %v1342 = vpack.c.b16 %v948, %v946
    %v1343 = vpack.c.b16 %v949, %v947
    %v1344 = vpack.c.b16 %v952, %v950
    %v1345 = vpack.c.b16 %v953, %v951
    %v1346 = vpack.c.b16 %v956, %v954
    %v1347 = vpack.c.b16 %v957, %v955
    %v1348 = vpack.c.b16 %v960, %v958
    %v1349 = vpack.c.b16 %v961, %v959
    %v1350 = vpack.c.b16 %v964, %v962
    %v1351 = vpack.c.b16 %v965, %v963
    %v1352 = vpack.c.b16 %v968, %v966
    %v1353 = vpack.c.b16 %v969, %v967
    %v1354 = vpack.c.b16 %v972, %v970
    %v1355 = vpack.c.b16 %v973, %v971
    %v1356 = vpack.c.b16 %v976, %v974
    %v1357 = vpack.c.b16 %v977, %v975
    %v1358 = vpack.c.b16 %v980, %v978
    %v1359 = vpack.c.b16 %v981, %v979
    %v1360 = vpack.c.b16 %v984, %v982
    %v1361 = vpack.c.b16 %v985, %v983
    %v1362 = vpack.c.b16 %v988, %v986
    %v1363 = vpack.c.b16 %v989, %v987
    %v1364 = vpack.c.b16 %v992, %v990
    %v1365 = vpack.c.b16 %v993, %v991
    %v1366 = vpack.c.b16 %v996, %v994
    %v1367 = vpack.c.b16 %v997, %v995
    %v1368 = vpack.c.b16 %v1000, %v998
    %v1369 = vpack.c.b16 %v1001, %v999
    %v1370 = vpack.c.b16 %v1004, %v1002
    %v1371 = vpack.c.b16 %v1005, %v1003
    %v1372 = vpack.c.b16 %v1008, %v1006
    %v1373 = vpack.c.b16 %v1009, %v1007
    %v1374 = vpack.c.b16 %v1012, %v1010
    %v1375 = vpack.c.b16 %v1013, %v1011
    %v1376 = vpack.c.b16 %v1016, %v1014
    %v1377 = vpack.c.b16 %v1017, %v1015
    %v1378 = vpack.c.b16 %v1020, %v1018
    %v1379 = vpack.c.b16 %v1021, %v1019
    %v1380 = vpack.c.b16 %v1024, %v1022
    %v1381 = vpack.c.b16 %v1025, %v1023
    %v1382 = vpack.c.b16 %v1028, %v1026
    %v1383 = vpack.c.b16 %v1029, %v1027
    %v1384 = vpack.c.b16 %v1032, %v1030
    %v1385 = vpack.c.b16 %v1033, %v1031
    %v1386 = vpack.c.b16 %v1036, %v1034
    %v1387 = vpack.c.b16 %v1037, %v1035
    %v1388 = vpack.c.b16 %v1040, %v1038
    %v1389 = vpack.c.b16 %v1041, %v1039
    %v1390 = vpack.c.b16 %v1044, %v1042
    %v1391 = vpack.c.b16 %v1045, %v1043
    %v1392 = vpack.c.b16 %v1048, %v1046
    %v1393 = vpack.c.b16 %v1049, %v1047
    %v1394 = vpack.c.b16 %v1052, %v1050
    %v1395 = vpack.c.b16 %v1053, %v1051
    %v1396 = vpack.c.b16 %v1056, %v1054
    %v1397 = vpack.c.b16 %v1057, %v1055
    %v1398 = vpack.c.b16 %v1060, %v1058
    %v1399 = vpack.c.b16 %v1061, %v1059
    %v1400 = vpack.c.b16 %v1064, %v1062
    %v1401 = vpack.c.b16 %v1065, %v1063
    %v1402 = vpack.c.b16 %v1068, %v1066
    %v1403 = vpack.c.b16 %v1069, %v1067
    %v1404 = vpack.c.b16 %v1072, %v1070
    %v1405 = vpack.c.b16 %v1073, %v1071
    %v1406 = vpack.c.b16 %v1076, %v1074
    %v1407 = vpack.c.b16 %v1077, %v1075
    %v1408 = vpack.c.b16 %v1080, %v1078
    %v1409 = vpack.c.b16 %v1081, %v1079
    %v1410 = vpack.c.b16 %v1084, %v1082
    %v1411 = vpack.c.b16 %v1085, %v1083
    %v1412 = vpack.c.b16 %v1088, %v1086
    %v1413 = vpack.c.b16 %v1089, %v1087
    %v1414 = vpack.c.b16 %v1092, %v1090
    %v1415 = vpack.c.b16 %v1093, %v1091
    %v1416 = vpack.c.b16 %v1096, %v1094
    %v1417 = vpack.c.b16 %v1097, %v1095
    %v1418 = vpack.c.b16 %v1100, %v1098
    %v1419 = vpack.c.b16 %v1101, %v1099
    %v1420 = vpack.c.b16 %v1104, %v1102
    %v1421 = vpack.c.b16 %v1105, %v1103
    %v1422 = vpack.c.b16 %v1108, %v1106
    %v1423 = vpack.c.b16 %v1109, %v1107
    %v1424 = vpack.c.b16 %v1112, %v1110
    %v1425 = vpack.c.b16 %v1113, %v1111
    %v1426 = vpack.c.b16 %v1116, %v1114
    %v1427 = vpack.c.b16 %v1117, %v1115
    %v1428 = vpack.c.b16 %v1120, %v1118
    %v1429 = vpack.c.b16 %v1121, %v1119
    %v1430 = vpack.c.b16 %v1124, %v1122
    %v1431 = vpack.c.b16 %v1125, %v1123
    %v1432 = vpack.c.b16 %v1128, %v1126
    %v1433 = vpack.c.b16 %v1129, %v1127
    %v1434 = vpack.c.b16 %v1132, %v1130
    %v1435 = vpack.c.b16 %v1133, %v1131
    %v1436 = vpack.c.b16 %v1136, %v1134
    %v1437 = vpack.c.b16 %v1137, %v1135
    %v1438 = vpack.c.b16 %v1140, %v1138
    %v1439 = vpack.c.b16 %v1141, %v1139
    %v1440 = vpack.c.b16 %v1144, %v1142
    %v1441 = vpack.c.b16 %v1145, %v1143
    %v1442 = vpack.c.b16 %v1148, %v1146
    %v1443 = vpack.c.b16 %v1149, %v1147
    %v1444 = vpack.c.b16 %v1152, %v1150
    %v1445 = vpack.c.b16 %v1153, %v1151
    %v1446 = vpack.c.b16 %v1156, %v1154
    %v1447 = vpack.c.b16 %v1157, %v1155
    %v1448 = vpack.c.b16 %v1160, %v1158
    %v1449 = vpack.c.b16 %v1161, %v1159
    %v1450 = vpack.c.b16 %v1164, %v1162
    %v1451 = vpack.c.b16 %v1165, %v1163
    %v1452 = vpack.c.b16 %v1168, %v1166
    %v1453 = vpack.c.b16 %v1169, %v1167
    %v1454 = vpack.c.b16 %v1172, %v1170
    %v1455 = vpack.c.b16 %v1173, %v1171
    %v1456 = vpack.c.b16 %v1176, %v1174
    %v1457 = vpack.c.b16 %v1177, %v1175
    %v1458 = vpack.c.b16 %v1180, %v1178
    %v1459 = vpack.c.b16 %v1181, %v1179
    %v1460 = vpack.c.b16 %v1184, %v1182
    %v1461 = vpack.c.b16 %v1185, %v1183
    %v1462 = vpack.c.b16 %v1188, %v1186
    %v1463 = vpack.c.b16 %v1189, %v1187
    %v1464 = vpack.c.b16 %v1192, %v1190
    %v1465 = vpack.c.b16 %v1193, %v1191
    %v1466 = vpack.c.b16 %v1196, %v1194
    %v1467 = vpack.c.b16 %v1197, %v1195
    %v1468 = vpack.c.b16 %v1200, %v1198
    %v1469 = vpack.c.b16 %v1201, %v1199
    %v1470 = vpack.c.b16 %v1204, %v1202
    %v1471 = vpack.c.b16 %v1205, %v1203
    %v1472 = vpack.c.b16 %v1208, %v1206
    %v1473 = vpack.c.b16 %v1209, %v1207
    %v1474 = vpack.c.b16 %v1212, %v1210
    %v1475 = vpack.c.b16 %v1213, %v1211
    %v1476 = vpack.c.b16 %v1216, %v1214
    %v1477 = vpack.c.b16 %v1217, %v1215
    %v1478 = vpack.c.b16 %v1220, %v1218
    %v1479 = vpack.c.b16 %v1221, %v1219
    %v1480 = vpack.c.b16 %v1224, %v1222
    %v1481 = vpack.c.b16 %v1225, %v1223
    %1738 = vmatprep.subr.bf16.mxu0 %v1227
    %1739 = vmatpush1.bf16.msra.mxu0 %v1226
    %1740 = vmatprep.subr.bf16.mxu0 %v1229
    %1741 = vmatpush1.bf16.msra.mxu0 %v1228
    %1742 = vmatprep.subr.bf16.mxu0 %v1231
    %1743 = vmatpush1.bf16.msra.mxu0 %v1230
    %1744 = vmatprep.subr.bf16.mxu0 %v1233
    %1745 = vmatpush1.bf16.msra.mxu0 %v1232
    %1746 = vmatprep.subr.bf16.mxu0 %v1235
    %1747 = vmatpush1.bf16.msra.mxu0 %v1234
    %1748 = vmatprep.subr.bf16.mxu0 %v1237
    %1749 = vmatpush1.bf16.msra.mxu0 %v1236
    %1750 = vmatprep.subr.bf16.mxu0 %v1239
    %1751 = vmatpush1.bf16.msra.mxu0 %v1238
    %1752 = vmatprep.subr.bf16.mxu0 %v1241
    %1753 = vmatpush1.bf16.msra.mxu0 %v1240
    %1754 = vmatprep.subr.bf16.mxu0 %v1243
    %1755 = vmatpush1.bf16.msra.mxu0 %v1242
    %1756 = vmatprep.subr.bf16.mxu0 %v1245
    %1757 = vmatpush1.bf16.msra.mxu0 %v1244
    %1758 = vmatprep.subr.bf16.mxu0 %v1247
    %1759 = vmatpush1.bf16.msra.mxu0 %v1246
    %1760 = vmatprep.subr.bf16.mxu0 %v1249
    %1761 = vmatpush1.bf16.msra.mxu0 %v1248
    %1762 = vmatprep.subr.bf16.mxu0 %v1251
    %1763 = vmatpush1.bf16.msra.mxu0 %v1250
    %1764 = vmatprep.subr.bf16.mxu0 %v1253
    %1765 = vmatpush1.bf16.msra.mxu0 %v1252
    %1766 = vmatprep.subr.bf16.mxu0 %v1255
    %1767 = vmatpush1.bf16.msra.mxu0 %v1254
    %1768 = vmatprep.subr.bf16.mxu0 %v1257
    %1769 = vmatpush1.bf16.msra.mxu0 %v1256
    %1770 = vmatprep.mubr.bf16.mxu0 %v143
    %1771 = vmatmul.mubr.bf16.gmra.mrb[0].mxu0 %v142
    %v1772 = vpop.f32.mrb[0].mxu0
    %v1773 = vadd.f32 %v451, %v1772
    %v1774 = vpop.f32.mrb[0].mxu0
    %v1775 = vadd.f32 %v455, %v1774
    %v1776 = vpop.f32.mrb[0].mxu0
    %v1777 = vadd.f32 %v451, %v1776
    %v1778 = vpop.f32.mrb[0].mxu0
    %v1779 = vadd.f32 %v455, %v1778
    %1780 = vmatprep.mubr.bf16.mxu0 %v159
    %1781 = vmatmul.mubr.bf16.gmra.mrb[0].mxu0 %v158
    %v1782 = vpop.f32.mrb[0].mxu0
    %v1783 = vadd.f32 %v451, %v1782
    %v1784 = vpop.f32.mrb[0].mxu0
    %v1785 = vadd.f32 %v455, %v1784
    %v1786 = vpop.f32.mrb[0].mxu0
    %v1787 = vadd.f32 %v451, %v1786
    %v1788 = vpop.f32.mrb[0].mxu0
    %v1789 = vadd.f32 %v455, %v1788
    %1790 = vmatprep.mubr.bf16.mxu0 %v175
    %1791 = vmatmul.mubr.bf16.gmra.mrb[0].mxu0 %v174
    %v1792 = vpop.f32.mrb[0].mxu0
    %v1793 = vadd.f32 %v451, %v1792
    %v1794 = vpop.f32.mrb[0].mxu0
    %v1795 = vadd.f32 %v455, %v1794
    %v1796 = vpop.f32.mrb[0].mxu0
    %v1797 = vpop.f32.mrb[0].mxu0
    %1798 = vdwg.mxu0
    %1799 = vmatprep.subr.bf16.mxu0 %v1259
    %1800 = vmatpush1.bf16.msra.mxu0 %v1258
    %1801 = vmatprep.subr.bf16.mxu0 %v1261
    %1802 = vmatpush1.bf16.msra.mxu0 %v1260
    %1803 = vmatprep.subr.bf16.mxu0 %v1263
    %1804 = vmatpush1.bf16.msra.mxu0 %v1262
    %1805 = vmatprep.subr.bf16.mxu0 %v1265
    %1806 = vmatpush1.bf16.msra.mxu0 %v1264
    %1807 = vmatprep.subr.bf16.mxu0 %v1267
    %1808 = vmatpush1.bf16.msra.mxu0 %v1266
    %1809 = vmatprep.subr.bf16.mxu0 %v1269
    %1810 = vmatpush1.bf16.msra.mxu0 %v1268
    %1811 = vmatprep.subr.bf16.mxu0 %v1271
    %1812 = vmatpush1.bf16.msra.mxu0 %v1270
    %1813 = vmatprep.subr.bf16.mxu0 %v1273
    %1814 = vmatpush1.bf16.msra.mxu0 %v1272
    %1815 = vmatprep.subr.bf16.mxu0 %v1275
    %1816 = vmatpush1.bf16.msra.mxu0 %v1274
    %1817 = vmatprep.subr.bf16.mxu0 %v1277
    %1818 = vmatpush1.bf16.msra.mxu0 %v1276
    %1819 = vmatprep.subr.bf16.mxu0 %v1279
    %1820 = vmatpush1.bf16.msra.mxu0 %v1278
    %1821 = vmatprep.subr.bf16.mxu0 %v1281
    %1822 = vmatpush1.bf16.msra.mxu0 %v1280
    %1823 = vmatprep.subr.bf16.mxu0 %v1283
    %1824 = vmatpush1.bf16.msra.mxu0 %v1282
    %1825 = vmatprep.subr.bf16.mxu0 %v1285
    %1826 = vmatpush1.bf16.msra.mxu0 %v1284
    %1827 = vmatprep.subr.bf16.mxu0 %v1287
    %1828 = vmatpush1.bf16.msra.mxu0 %v1286
    %1829 = vmatprep.subr.bf16.mxu0 %v1289
    %1830 = vmatpush1.bf16.msra.mxu0 %v1288
    %1831 = vmatprep.mubr.bf16.mxu0 %v145
    %1832 = vmatmul.mubr.bf16.gmra.mrb[0].mxu0 %v144
    %v1833 = vpop.f32.mrb[0].mxu0
    %v1834 = vadd.f32 %v1773, %v1833
    %v1835 = vpop.f32.mrb[0].mxu0
    %v1836 = vadd.f32 %v1775, %v1835
    %v1837 = vpop.f32.mrb[0].mxu0
    %v1838 = vadd.f32 %v1777, %v1837
    %v1839 = vpop.f32.mrb[0].mxu0
    %v1840 = vadd.f32 %v1779, %v1839
    %1841 = vmatprep.mubr.bf16.mxu0 %v161
    %1842 = vmatmul.mubr.bf16.gmra.mrb[0].mxu0 %v160
    %v1843 = vpop.f32.mrb[0].mxu0
    %v1844 = vadd.f32 %v1783, %v1843
    %v1845 = vpop.f32.mrb[0].mxu0
    %v1846 = vadd.f32 %v1785, %v1845
    %v1847 = vpop.f32.mrb[0].mxu0
    %v1848 = vadd.f32 %v1787, %v1847
    %v1849 = vpop.f32.mrb[0].mxu0
    %v1850 = vadd.f32 %v1789, %v1849
    %1851 = vmatprep.mubr.bf16.mxu0 %v177
    %1852 = vmatmul.mubr.bf16.gmra.mrb[0].mxu0 %v176
    %v1853 = vpop.f32.mrb[0].mxu0
    %v1854 = vadd.f32 %v1793, %v1853
    %v1855 = vpop.f32.mrb[0].mxu0
    %v1856 = vadd.f32 %v1795, %v1855
    %v1857 = vpop.f32.mrb[0].mxu0
    %v1858 = vpop.f32.mrb[0].mxu0
    %1859 = vdwg.mxu0
    %1860 = vmatprep.subr.bf16.mxu0 %v1291
    %1861 = vmatpush1.bf16.msra.mxu0 %v1290
    %1862 = vmatprep.subr.bf16.mxu0 %v1293
    %1863 = vmatpush1.bf16.msra.mxu0 %v1292
    %1864 = vmatprep.subr.bf16.mxu0 %v1295
    %1865 = vmatpush1.bf16.msra.mxu0 %v1294
    %1866 = vmatprep.subr.bf16.mxu0 %v1297
    %1867 = vmatpush1.bf16.msra.mxu0 %v1296
    %1868 = vmatprep.subr.bf16.mxu0 %v1299
    %1869 = vmatpush1.bf16.msra.mxu0 %v1298
    %1870 = vmatprep.subr.bf16.mxu0 %v1301
    %1871 = vmatpush1.bf16.msra.mxu0 %v1300
    %1872 = vmatprep.subr.bf16.mxu0 %v1303
    %1873 = vmatpush1.bf16.msra.mxu0 %v1302
    %1874 = vmatprep.subr.bf16.mxu0 %v1305
    %1875 = vmatpush1.bf16.msra.mxu0 %v1304
    %1876 = vmatprep.subr.bf16.mxu0 %v1307
    %1877 = vmatpush1.bf16.msra.mxu0 %v1306
    %1878 = vmatprep.subr.bf16.mxu0 %v1309
    %1879 = vmatpush1.bf16.msra.mxu0 %v1308
    %1880 = vmatprep.subr.bf16.mxu0 %v1311
    %1881 = vmatpush1.bf16.msra.mxu0 %v1310
    %1882 = vmatprep.subr.bf16.mxu0 %v1313
    %1883 = vmatpush1.bf16.msra.mxu0 %v1312
    %1884 = vmatprep.subr.bf16.mxu0 %v1315
    %1885 = vmatpush1.bf16.msra.mxu0 %v1314
    %1886 = vmatprep.subr.bf16.mxu0 %v1317
    %1887 = vmatpush1.bf16.msra.mxu0 %v1316
    %1888 = vmatprep.subr.bf16.mxu0 %v1319
    %1889 = vmatpush1.bf16.msra.mxu0 %v1318
    %1890 = vmatprep.subr.bf16.mxu0 %v1321
    %1891 = vmatpush1.bf16.msra.mxu0 %v1320
    %1892 = vmatprep.mubr.bf16.mxu0 %v147
    %1893 = vmatmul.mubr.bf16.gmra.mrb[0].mxu0 %v146
    %v1894 = vpop.f32.mrb[0].mxu0
    %v1895 = vadd.f32 %v1834, %v1894
    %v1896 = vpop.f32.mrb[0].mxu0
    %v1897 = vadd.f32 %v1836, %v1896
    %v1898 = vpop.f32.mrb[0].mxu0
    %v1899 = vadd.f32 %v1838, %v1898
    %v1900 = vpop.f32.mrb[0].mxu0
    %v1901 = vadd.f32 %v1840, %v1900
    %1902 = vmatprep.mubr.bf16.mxu0 %v163
    %1903 = vmatmul.mubr.bf16.gmra.mrb[0].mxu0 %v162
    %v1904 = vpop.f32.mrb[0].mxu0
    %v1905 = vadd.f32 %v1844, %v1904
    %v1906 = vpop.f32.mrb[0].mxu0
    %v1907 = vadd.f32 %v1846, %v1906
    %v1908 = vpop.f32.mrb[0].mxu0
    %v1909 = vadd.f32 %v1848, %v1908
    %v1910 = vpop.f32.mrb[0].mxu0
    %v1911 = vadd.f32 %v1850, %v1910
    %1912 = vmatprep.mubr.bf16.mxu0 %v179
    %1913 = vmatmul.mubr.bf16.gmra.mrb[0].mxu0 %v178
    %v1914 = vpop.f32.mrb[0].mxu0
    %v1915 = vadd.f32 %v1854, %v1914
    %v1916 = vpop.f32.mrb[0].mxu0
    %v1917 = vadd.f32 %v1856, %v1916
    %v1918 = vpop.f32.mrb[0].mxu0
    %v1919 = vpop.f32.mrb[0].mxu0
    %1920 = vdwg.mxu0
    %1921 = vmatprep.subr.bf16.mxu0 %v1323
    %1922 = vmatpush1.bf16.msra.mxu0 %v1322
    %1923 = vmatprep.subr.bf16.mxu0 %v1325
    %1924 = vmatpush1.bf16.msra.mxu0 %v1324
    %1925 = vmatprep.subr.bf16.mxu0 %v1327
    %1926 = vmatpush1.bf16.msra.mxu0 %v1326
    %1927 = vmatprep.subr.bf16.mxu0 %v1329
    %1928 = vmatpush1.bf16.msra.mxu0 %v1328
    %1929 = vmatprep.subr.bf16.mxu0 %v1331
    %1930 = vmatpush1.bf16.msra.mxu0 %v1330
    %1931 = vmatprep.subr.bf16.mxu0 %v1333
    %1932 = vmatpush1.bf16.msra.mxu0 %v1332
    %1933 = vmatprep.subr.bf16.mxu0 %v1335
    %1934 = vmatpush1.bf16.msra.mxu0 %v1334
    %1935 = vmatprep.subr.bf16.mxu0 %v1337
    %1936 = vmatpush1.bf16.msra.mxu0 %v1336
    %1937 = vmatprep.subr.bf16.mxu0 %v1339
    %1938 = vmatpush1.bf16.msra.mxu0 %v1338
    %1939 = vmatprep.subr.bf16.mxu0 %v1341
    %1940 = vmatpush1.bf16.msra.mxu0 %v1340
    %1941 = vmatprep.subr.bf16.mxu0 %v1343
    %1942 = vmatpush1.bf16.msra.mxu0 %v1342
    %1943 = vmatprep.subr.bf16.mxu0 %v1345
    %1944 = vmatpush1.bf16.msra.mxu0 %v1344
    %1945 = vmatprep.subr.bf16.mxu0 %v1347
    %1946 = vmatpush1.bf16.msra.mxu0 %v1346
    %1947 = vmatprep.subr.bf16.mxu0 %v1349
    %1948 = vmatpush1.bf16.msra.mxu0 %v1348
    %1949 = vmatprep.subr.bf16.mxu0 %v1351
    %1950 = vmatpush1.bf16.msra.mxu0 %v1350
    %1951 = vmatprep.subr.bf16.mxu0 %v1353
    %1952 = vmatpush1.bf16.msra.mxu0 %v1352
    %1953 = vmatprep.mubr.bf16.mxu0 %v149
    %1954 = vmatmul.mubr.bf16.gmra.mrb[0].mxu0 %v148
    %v1955 = vpop.f32.mrb[0].mxu0
    %v1956 = vadd.f32 %v1895, %v1955
    %v1957 = vpop.f32.mrb[0].mxu0
    %v1958 = vadd.f32 %v1897, %v1957
    %v1959 = vpop.f32.mrb[0].mxu0
    %v1960 = vadd.f32 %v1899, %v1959
    %v1961 = vpop.f32.mrb[0].mxu0
    %v1962 = vadd.f32 %v1901, %v1961
    %1963 = vmatprep.mubr.bf16.mxu0 %v165
    %1964 = vmatmul.mubr.bf16.gmra.mrb[0].mxu0 %v164
    %v1965 = vpop.f32.mrb[0].mxu0
    %v1966 = vadd.f32 %v1905, %v1965
    %v1967 = vpop.f32.mrb[0].mxu0
    %v1968 = vadd.f32 %v1907, %v1967
    %v1969 = vpop.f32.mrb[0].mxu0
    %v1970 = vadd.f32 %v1909, %v1969
    %v1971 = vpop.f32.mrb[0].mxu0
    %v1972 = vadd.f32 %v1911, %v1971
    %1973 = vmatprep.mubr.bf16.mxu0 %v181
    %1974 = vmatmul.mubr.bf16.gmra.mrb[0].mxu0 %v180
    %v1975 = vpop.f32.mrb[0].mxu0
    %v1976 = vadd.f32 %v1915, %v1975
    %v1977 = vpop.f32.mrb[0].mxu0
    %v1978 = vadd.f32 %v1917, %v1977
    %v1979 = vpop.f32.mrb[0].mxu0
    %v1980 = vpop.f32.mrb[0].mxu0
    %1981 = vdwg.mxu0
    %1982 = vmatprep.subr.bf16.mxu0 %v1355
    %1983 = vmatpush1.bf16.msra.mxu0 %v1354
    %1984 = vmatprep.subr.bf16.mxu0 %v1357
    %1985 = vmatpush1.bf16.msra.mxu0 %v1356
    %1986 = vmatprep.subr.bf16.mxu0 %v1359
    %1987 = vmatpush1.bf16.msra.mxu0 %v1358
    %1988 = vmatprep.subr.bf16.mxu0 %v1361
    %1989 = vmatpush1.bf16.msra.mxu0 %v1360
    %1990 = vmatprep.subr.bf16.mxu0 %v1363
    %1991 = vmatpush1.bf16.msra.mxu0 %v1362
    %1992 = vmatprep.subr.bf16.mxu0 %v1365
    %1993 = vmatpush1.bf16.msra.mxu0 %v1364
    %1994 = vmatprep.subr.bf16.mxu0 %v1367
    %1995 = vmatpush1.bf16.msra.mxu0 %v1366
    %1996 = vmatprep.subr.bf16.mxu0 %v1369
    %1997 = vmatpush1.bf16.msra.mxu0 %v1368
    %1998 = vmatprep.subr.bf16.mxu0 %v1371
    %1999 = vmatpush1.bf16.msra.mxu0 %v1370
    %2000 = vmatprep.subr.bf16.mxu0 %v1373
    %2001 = vmatpush1.bf16.msra.mxu0 %v1372
    %2002 = vmatprep.subr.bf16.mxu0 %v1375
    %2003 = vmatpush1.bf16.msra.mxu0 %v1374
    %2004 = vmatprep.subr.bf16.mxu0 %v1377
    %2005 = vmatpush1.bf16.msra.mxu0 %v1376
    %2006 = vmatprep.subr.bf16.mxu0 %v1379
    %2007 = vmatpush1.bf16.msra.mxu0 %v1378
    %2008 = vmatprep.subr.bf16.mxu0 %v1381
    %2009 = vmatpush1.bf16.msra.mxu0 %v1380
    %2010 = vmatprep.subr.bf16.mxu0 %v1383
    %2011 = vmatpush1.bf16.msra.mxu0 %v1382
    %2012 = vmatprep.subr.bf16.mxu0 %v1385
    %2013 = vmatpush1.bf16.msra.mxu0 %v1384
    %2014 = vmatprep.mubr.bf16.mxu0 %v151
    %2015 = vmatmul.mubr.bf16.gmra.mrb[0].mxu0 %v150
    %v2016 = vpop.f32.mrb[0].mxu0
    %v2017 = vadd.f32 %v1956, %v2016
    %v2018 = vpop.f32.mrb[0].mxu0
    %v2019 = vadd.f32 %v1958, %v2018
    %v2020 = vpop.f32.mrb[0].mxu0
    %v2021 = vadd.f32 %v1960, %v2020
    %v2022 = vpop.f32.mrb[0].mxu0
    %v2023 = vadd.f32 %v1962, %v2022
    %2024 = vmatprep.mubr.bf16.mxu0 %v167
    %2025 = vmatmul.mubr.bf16.gmra.mrb[0].mxu0 %v166
    %v2026 = vpop.f32.mrb[0].mxu0
    %v2027 = vadd.f32 %v1966, %v2026
    %v2028 = vpop.f32.mrb[0].mxu0
    %v2029 = vadd.f32 %v1968, %v2028
    %v2030 = vpop.f32.mrb[0].mxu0
    %v2031 = vadd.f32 %v1970, %v2030
    %v2032 = vpop.f32.mrb[0].mxu0
    %v2033 = vadd.f32 %v1972, %v2032
    %2034 = vmatprep.mubr.bf16.mxu0 %v183
    %2035 = vmatmul.mubr.bf16.gmra.mrb[0].mxu0 %v182
    %v2036 = vpop.f32.mrb[0].mxu0
    %v2037 = vadd.f32 %v1976, %v2036
    %v2038 = vpop.f32.mrb[0].mxu0
    %v2039 = vadd.f32 %v1978, %v2038
    %v2040 = vpop.f32.mrb[0].mxu0
    %v2041 = vpop.f32.mrb[0].mxu0
    %2042 = vdwg.mxu0
    %2043 = vmatprep.subr.bf16.mxu0 %v1387
    %2044 = vmatpush1.bf16.msra.mxu0 %v1386
    %2045 = vmatprep.subr.bf16.mxu0 %v1389
    %2046 = vmatpush1.bf16.msra.mxu0 %v1388
    %2047 = vmatprep.subr.bf16.mxu0 %v1391
    %2048 = vmatpush1.bf16.msra.mxu0 %v1390
    %2049 = vmatprep.subr.bf16.mxu0 %v1393
    %2050 = vmatpush1.bf16.msra.mxu0 %v1392
    %2051 = vmatprep.subr.bf16.mxu0 %v1395
    %2052 = vmatpush1.bf16.msra.mxu0 %v1394
    %2053 = vmatprep.subr.bf16.mxu0 %v1397
    %2054 = vmatpush1.bf16.msra.mxu0 %v1396
    %2055 = vmatprep.subr.bf16.mxu0 %v1399
    %2056 = vmatpush1.bf16.msra.mxu0 %v1398
    %2057 = vmatprep.subr.bf16.mxu0 %v1401
    %2058 = vmatpush1.bf16.msra.mxu0 %v1400
    %2059 = vmatprep.subr.bf16.mxu0 %v1403
    %2060 = vmatpush1.bf16.msra.mxu0 %v1402
    %2061 = vmatprep.subr.bf16.mxu0 %v1405
    %2062 = vmatpush1.bf16.msra.mxu0 %v1404
    %2063 = vmatprep.subr.bf16.mxu0 %v1407
    %2064 = vmatpush1.bf16.msra.mxu0 %v1406
    %2065 = vmatprep.subr.bf16.mxu0 %v1409
    %2066 = vmatpush1.bf16.msra.mxu0 %v1408
    %2067 = vmatprep.subr.bf16.mxu0 %v1411
    %2068 = vmatpush1.bf16.msra.mxu0 %v1410
    %2069 = vmatprep.subr.bf16.mxu0 %v1413
    %2070 = vmatpush1.bf16.msra.mxu0 %v1412
    %2071 = vmatprep.subr.bf16.mxu0 %v1415
    %2072 = vmatpush1.bf16.msra.mxu0 %v1414
    %2073 = vmatprep.subr.bf16.mxu0 %v1417
    %2074 = vmatpush1.bf16.msra.mxu0 %v1416
    %2075 = vmatprep.mubr.bf16.mxu0 %v153
    %2076 = vmatmul.mubr.bf16.gmra.mrb[0].mxu0 %v152
    %v2077 = vpop.f32.mrb[0].mxu0
    %v2078 = vadd.f32 %v2017, %v2077
    %v2079 = vpop.f32.mrb[0].mxu0
    %v2080 = vadd.f32 %v2019, %v2079
    %v2081 = vpop.f32.mrb[0].mxu0
    %v2082 = vadd.f32 %v2021, %v2081
    %v2083 = vpop.f32.mrb[0].mxu0
    %v2084 = vadd.f32 %v2023, %v2083
    %2085 = vmatprep.mubr.bf16.mxu0 %v169
    %2086 = vmatmul.mubr.bf16.gmra.mrb[0].mxu0 %v168
    %v2087 = vpop.f32.mrb[0].mxu0
    %v2088 = vadd.f32 %v2027, %v2087
    %v2089 = vpop.f32.mrb[0].mxu0
    %v2090 = vadd.f32 %v2029, %v2089
    %v2091 = vpop.f32.mrb[0].mxu0
    %v2092 = vadd.f32 %v2031, %v2091
    %v2093 = vpop.f32.mrb[0].mxu0
    %v2094 = vadd.f32 %v2033, %v2093
    %2095 = vmatprep.mubr.bf16.mxu0 %v185
    %2096 = vmatmul.mubr.bf16.gmra.mrb[0].mxu0 %v184
    %v2097 = vpop.f32.mrb[0].mxu0
    %v2098 = vadd.f32 %v2037, %v2097
    %v2099 = vpop.f32.mrb[0].mxu0
    %v2100 = vadd.f32 %v2039, %v2099
    %v2101 = vpop.f32.mrb[0].mxu0
    %v2102 = vpop.f32.mrb[0].mxu0
    %2103 = vdwg.mxu0
    %2104 = vmatprep.subr.bf16.mxu0 %v1419
    %2105 = vmatpush1.bf16.msra.mxu0 %v1418
    %2106 = vmatprep.subr.bf16.mxu0 %v1421
    %2107 = vmatpush1.bf16.msra.mxu0 %v1420
    %2108 = vmatprep.subr.bf16.mxu0 %v1423
    %2109 = vmatpush1.bf16.msra.mxu0 %v1422
    %2110 = vmatprep.subr.bf16.mxu0 %v1425
    %2111 = vmatpush1.bf16.msra.mxu0 %v1424
    %2112 = vmatprep.subr.bf16.mxu0 %v1427
    %2113 = vmatpush1.bf16.msra.mxu0 %v1426
    %2114 = vmatprep.subr.bf16.mxu0 %v1429
    %2115 = vmatpush1.bf16.msra.mxu0 %v1428
    %2116 = vmatprep.subr.bf16.mxu0 %v1431
    %2117 = vmatpush1.bf16.msra.mxu0 %v1430
    %2118 = vmatprep.subr.bf16.mxu0 %v1433
    %2119 = vmatpush1.bf16.msra.mxu0 %v1432
    %2120 = vmatprep.subr.bf16.mxu0 %v1435
    %2121 = vmatpush1.bf16.msra.mxu0 %v1434
    %2122 = vmatprep.subr.bf16.mxu0 %v1437
    %2123 = vmatpush1.bf16.msra.mxu0 %v1436
    %2124 = vmatprep.subr.bf16.mxu0 %v1439
    %2125 = vmatpush1.bf16.msra.mxu0 %v1438
    %2126 = vmatprep.subr.bf16.mxu0 %v1441
    %2127 = vmatpush1.bf16.msra.mxu0 %v1440
    %2128 = vmatprep.subr.bf16.mxu0 %v1443
    %2129 = vmatpush1.bf16.msra.mxu0 %v1442
    %2130 = vmatprep.subr.bf16.mxu0 %v1445
    %2131 = vmatpush1.bf16.msra.mxu0 %v1444
    %2132 = vmatprep.subr.bf16.mxu0 %v1447
    %2133 = vmatpush1.bf16.msra.mxu0 %v1446
    %2134 = vmatprep.subr.bf16.mxu0 %v1449
    %2135 = vmatpush1.bf16.msra.mxu0 %v1448
    %2136 = vmatprep.mubr.bf16.mxu0 %v155
    %2137 = vmatmul.mubr.bf16.gmra.mrb[0].mxu0 %v154
    %v2138 = vpop.f32.mrb[0].mxu0
    %v2139 = vadd.f32 %v2078, %v2138
    %v2140 = vpop.f32.mrb[0].mxu0
    %v2141 = vadd.f32 %v2080, %v2140
    %v2142 = vpop.f32.mrb[0].mxu0
    %v2143 = vadd.f32 %v2082, %v2142
    %v2144 = vpop.f32.mrb[0].mxu0
    %v2145 = vadd.f32 %v2084, %v2144
    %2146 = vmatprep.mubr.bf16.mxu0 %v171
    %2147 = vmatmul.mubr.bf16.gmra.mrb[0].mxu0 %v170
    %v2148 = vpop.f32.mrb[0].mxu0
    %v2149 = vadd.f32 %v2088, %v2148
    %v2150 = vpop.f32.mrb[0].mxu0
    %v2151 = vadd.f32 %v2090, %v2150
    %v2152 = vpop.f32.mrb[0].mxu0
    %v2153 = vadd.f32 %v2092, %v2152
    %v2154 = vpop.f32.mrb[0].mxu0
    %v2155 = vadd.f32 %v2094, %v2154
    %2156 = vmatprep.mubr.bf16.mxu0 %v187
    %2157 = vmatmul.mubr.bf16.gmra.mrb[0].mxu0 %v186
    %v2158 = vpop.f32.mrb[0].mxu0
    %v2159 = vadd.f32 %v2098, %v2158
    %v2160 = vpop.f32.mrb[0].mxu0
    %v2161 = vadd.f32 %v2100, %v2160
    %v2162 = vpop.f32.mrb[0].mxu0
    %v2163 = vpop.f32.mrb[0].mxu0
    %2164 = vdwg.mxu0
    %2165 = vmatprep.subr.bf16.mxu0 %v1451
    %2166 = vmatpush1.bf16.msra.mxu0 %v1450
    %2167 = vmatprep.subr.bf16.mxu0 %v1453
    %2168 = vmatpush1.bf16.msra.mxu0 %v1452
    %2169 = vmatprep.subr.bf16.mxu0 %v1455
    %2170 = vmatpush1.bf16.msra.mxu0 %v1454
    %2171 = vmatprep.subr.bf16.mxu0 %v1457
    %2172 = vmatpush1.bf16.msra.mxu0 %v1456
    %2173 = vmatprep.subr.bf16.mxu0 %v1459
    %2174 = vmatpush1.bf16.msra.mxu0 %v1458
    %2175 = vmatprep.subr.bf16.mxu0 %v1461
    %2176 = vmatpush1.bf16.msra.mxu0 %v1460
    %2177 = vmatprep.subr.bf16.mxu0 %v1463
    %2178 = vmatpush1.bf16.msra.mxu0 %v1462
    %2179 = vmatprep.subr.bf16.mxu0 %v1465
    %2180 = vmatpush1.bf16.msra.mxu0 %v1464
    %2181 = vmatprep.subr.bf16.mxu0 %v1467
    %2182 = vmatpush1.bf16.msra.mxu0 %v1466
    %2183 = vmatprep.subr.bf16.mxu0 %v1469
    %2184 = vmatpush1.bf16.msra.mxu0 %v1468
    %2185 = vmatprep.subr.bf16.mxu0 %v1471
    %2186 = vmatpush1.bf16.msra.mxu0 %v1470
    %2187 = vmatprep.subr.bf16.mxu0 %v1473
    %2188 = vmatpush1.bf16.msra.mxu0 %v1472
    %2189 = vmatprep.subr.bf16.mxu0 %v1475
    %2190 = vmatpush1.bf16.msra.mxu0 %v1474
    %2191 = vmatprep.subr.bf16.mxu0 %v1477
    %2192 = vmatpush1.bf16.msra.mxu0 %v1476
    %2193 = vmatprep.subr.bf16.mxu0 %v1479
    %2194 = vmatpush1.bf16.msra.mxu0 %v1478
    %2195 = vmatprep.subr.bf16.mxu0 %v1481
    %2196 = vmatpush1.bf16.msra.mxu0 %v1480
    %2197 = vmatprep.mubr.bf16.mxu0 %v157
    %2198 = vmatmul.mubr.bf16.gmra.mrb[0].mxu0 %v156
    %v2199 = vpop.f32.mrb[0].mxu0
    %v2200 = vadd.f32 %v2139, %v2199
    %v2201 = vpop.f32.mrb[0].mxu0
    %v2202 = vadd.f32 %v2141, %v2201
    %v2203 = vpop.f32.mrb[0].mxu0
    %v2204 = vadd.f32 %v2143, %v2203
    %v2205 = vpop.f32.mrb[0].mxu0
    %v2206 = vadd.f32 %v2145, %v2205
    %2207 = vmatprep.mubr.bf16.mxu0 %v173
    %2208 = vmatmul.mubr.bf16.gmra.mrb[0].mxu0 %v172
    %v2209 = vpop.f32.mrb[0].mxu0
    %v2210 = vadd.f32 %v2149, %v2209
    %v2211 = vpop.f32.mrb[0].mxu0
    %v2212 = vadd.f32 %v2151, %v2211
    %v2213 = vpop.f32.mrb[0].mxu0
    %v2214 = vadd.f32 %v2153, %v2213
    %v2215 = vpop.f32.mrb[0].mxu0
    %v2216 = vadd.f32 %v2155, %v2215
    %2217 = vmatprep.mubr.bf16.mxu0 %v189
    %2218 = vmatmul.mubr.bf16.gmra.mrb[0].mxu0 %v188
    %v2219 = vpop.f32.mrb[0].mxu0
    %v2220 = vadd.f32 %v2159, %v2219
    %v2221 = vpop.f32.mrb[0].mxu0
    %v2222 = vadd.f32 %v2161, %v2221
    %v2223 = vpop.f32.mrb[0].mxu0
    %v2224 = vpop.f32.mrb[0].mxu0
    %2225 = vdwg.mxu0
    %v2226 = vmax.f32 %v2200, 0.0
    %v2227 = vmax.f32 %v2202, 0.0
    %v2228 = vmax.f32 %v2204, 0.0
    %v2229 = vmax.f32 %v2206, 0.0
    %v2230 = vmax.f32 %v2210, 0.0
    %v2231 = vmax.f32 %v2212, 0.0
    %v2232 = vmax.f32 %v2214, 0.0
    %v2233 = vmax.f32 %v2216, 0.0
    %v2234 = vmax.f32 %v2220, 0.0
    %v2235 = vmax.f32 %v2222, 0.0
    %v2236 = vpack.c.bf16 %v2228, %v2226
    %v2237 = vpack.c.bf16 %v2229, %v2227
    %v2238 = vpack.c.bf16 %v2232, %v2230
    %v2239 = vpack.c.bf16 %v2233, %v2231
    %v2240 = vpack.c.bf16 %v2234, %v2234
    %v2241 = vpack.c.bf16 %v2235, %v2235
    %v2242 = vld [vmem:[#allocation6] sm:$0xf]
    %v2243 = vld [vmem:[#allocation6 + $0x4] sm:$0xf]
    %v2244 = vld [vmem:[#allocation6 + $0x8] sm:$0xf]
    %v2245 = vld [vmem:[#allocation6 + $0xc] sm:$0xf]
    %v2246 = vld [vmem:[#allocation6 + $0x10] sm:$0xf]
    %v2247 = vld [vmem:[#allocation6 + $0x14] sm:$0xf]
    %v2248 = vld [vmem:[#allocation6 + $0x18] sm:$0xf]
    %v2249 = vld [vmem:[#allocation6 + $0x1c] sm:$0xf]
    %v2250 = vld [vmem:[#allocation6 + $0x20] sm:$0xf]
    %v2251 = vld [vmem:[#allocation6 + $0x24] sm:$0xf]
    %v2252 = vld [vmem:[#allocation6 + $0x28] sm:$0xf]
    %v2253 = vld [vmem:[#allocation6 + $0x2c] sm:$0xf]
    %v2254 = vld [vmem:[#allocation6 + $0x30] sm:$0xf]
    %v2255 = vld [vmem:[#allocation6 + $0x34] sm:$0xf]
    %v2256 = vld [vmem:[#allocation6 + $0x38] sm:$0xf]
    %v2257 = vld [vmem:[#allocation6 + $0x3c] sm:$0xf]
    %v2258 = vld [vmem:[#allocation6 + $0x40] sm:$0xf]
    %v2259 = vld [vmem:[#allocation6 + $0x44] sm:$0xf]
    %v2260 = vld [vmem:[#allocation6 + $0x48] sm:$0xf]
    %v2261 = vld [vmem:[#allocation6 + $0x4c] sm:$0xf]
    %v2262 = vld [vmem:[#allocation6 + $0x50] sm:$0xf]
    %v2263 = vld [vmem:[#allocation6 + $0x54] sm:$0xf]
    %v2264 = vld [vmem:[#allocation6 + $0x58] sm:$0xf]
    %v2265 = vld [vmem:[#allocation6 + $0x5c] sm:$0xf]
    %v2266 = vld [vmem:[#allocation6 + $0x60] sm:$0xf]
    %v2267 = vld [vmem:[#allocation6 + $0x64] sm:$0xf]
    %v2268 = vld [vmem:[#allocation6 + $0x68] sm:$0xf]
    %v2269 = vld [vmem:[#allocation6 + $0x6c] sm:$0xf]
    %v2270 = vld [vmem:[#allocation6 + $0x70] sm:$0xf]
    %v2271 = vld [vmem:[#allocation6 + $0x74] sm:$0xf]
    %v2272 = vld [vmem:[#allocation6 + $0x78] sm:$0xf]
    %v2273 = vld [vmem:[#allocation6 + $0x7c] sm:$0xf]
    %v2274 = vld [vmem:[%s4] sm:$0x1]
    %v2276 = vlaneseq
    %v2277 = vshrl.u32 %v2276, 7
    %v2278 = vsub.s32 0, %v2277
    %v2279 = vrot.slane %v2274, %v2278
    %v2313 = vunpack.c.l.b16 %v2242
    %v2314 = vunpack.c.l.b16 %v2243
    %v2315 = vunpack.c.l.b16 %v2244
    %v2316 = vunpack.c.l.b16 %v2245
    %v2317 = vunpack.c.l.b16 %v2246
    %v2318 = vunpack.c.l.b16 %v2247
    %v2319 = vunpack.c.l.b16 %v2248
    %v2320 = vunpack.c.l.b16 %v2249
    %v2321 = vunpack.c.l.b16 %v2250
    %v2322 = vunpack.c.l.b16 %v2251
    %v2323 = vunpack.c.l.b16 %v2252
    %v2324 = vunpack.c.l.b16 %v2253
    %v2325 = vunpack.c.l.b16 %v2254
    %v2326 = vunpack.c.l.b16 %v2255
    %v2327 = vunpack.c.l.b16 %v2256
    %v2328 = vunpack.c.l.b16 %v2257
    %v2329 = vunpack.c.l.b16 %v2258
    %v2330 = vunpack.c.l.b16 %v2259
    %v2331 = vunpack.c.l.b16 %v2260
    %v2332 = vunpack.c.l.b16 %v2261
    %v2333 = vunpack.c.l.b16 %v2262
    %v2334 = vunpack.c.l.b16 %v2263
    %v2335 = vunpack.c.l.b16 %v2264
    %v2336 = vunpack.c.l.b16 %v2265
    %v2337 = vunpack.c.l.b16 %v2266
    %v2338 = vunpack.c.l.b16 %v2267
    %v2339 = vunpack.c.l.b16 %v2268
    %v2340 = vunpack.c.l.b16 %v2269
    %v2341 = vunpack.c.l.b16 %v2270
    %v2342 = vunpack.c.l.b16 %v2271
    %v2343 = vunpack.c.l.b16 %v2272
    %v2344 = vunpack.c.l.b16 %v2273
    %v2345 = vpack.c.b16 %v2314, %v2313
    %v2346 = vpack.c.b16 %v2316, %v2315
    %v2347 = vpack.c.b16 %v2318, %v2317
    %v2348 = vpack.c.b16 %v2320, %v2319
    %v2349 = vpack.c.b16 %v2322, %v2321
    %v2350 = vpack.c.b16 %v2324, %v2323
    %v2351 = vpack.c.b16 %v2326, %v2325
    %v2352 = vpack.c.b16 %v2328, %v2327
    %v2353 = vpack.c.b16 %v2330, %v2329
    %v2354 = vpack.c.b16 %v2332, %v2331
    %v2355 = vpack.c.b16 %v2334, %v2333
    %v2356 = vpack.c.b16 %v2336, %v2335
    %v2357 = vpack.c.b16 %v2338, %v2337
    %v2358 = vpack.c.b16 %v2340, %v2339
    %v2359 = vpack.c.b16 %v2342, %v2341
    %v2360 = vpack.c.b16 %v2344, %v2343
    %2377 = vmatprep.subr.bf16.mxu0 0
    %2378 = vmatpush1.bf16.msra.mxu0 %v2345
    %2379 = vmatprep.subr.bf16.mxu0 0
    %2380 = vmatpush1.bf16.msra.mxu0 %v2346
    %2381 = vmatprep.subr.bf16.mxu0 0
    %2382 = vmatpush1.bf16.msra.mxu0 %v2347
    %2383 = vmatprep.subr.bf16.mxu0 0
    %2384 = vmatpush1.bf16.msra.mxu0 %v2348
    %2385 = vmatprep.subr.bf16.mxu0 0
    %2386 = vmatpush1.bf16.msra.mxu0 %v2349
    %2387 = vmatprep.subr.bf16.mxu0 0
    %2388 = vmatpush1.bf16.msra.mxu0 %v2350
    %2389 = vmatprep.subr.bf16.mxu0 0
    %2390 = vmatpush1.bf16.msra.mxu0 %v2351
    %2391 = vmatprep.subr.bf16.mxu0 0
    %2392 = vmatpush1.bf16.msra.mxu0 %v2352
    %2393 = vmatprep.subr.bf16.mxu0 0
    %2394 = vmatpush1.bf16.msra.mxu0 %v2353
    %2395 = vmatprep.subr.bf16.mxu0 0
    %2396 = vmatpush1.bf16.msra.mxu0 %v2354
    %2397 = vmatprep.subr.bf16.mxu0 0
    %2398 = vmatpush1.bf16.msra.mxu0 %v2355
    %2399 = vmatprep.subr.bf16.mxu0 0
    %2400 = vmatpush1.bf16.msra.mxu0 %v2356
    %2401 = vmatprep.subr.bf16.mxu0 0
    %2402 = vmatpush1.bf16.msra.mxu0 %v2357
    %2403 = vmatprep.subr.bf16.mxu0 0
    %2404 = vmatpush1.bf16.msra.mxu0 %v2358
    %2405 = vmatprep.subr.bf16.mxu0 0
    %2406 = vmatpush1.bf16.msra.mxu0 %v2359
    %2407 = vmatprep.subr.bf16.mxu0 0
    %2408 = vmatpush1.bf16.msra.mxu0 %v2360
    %2409 = vmatprep.mubr.bf16.mxu0 %v2237
    %2410 = vmatmul.mubr.bf16.gmra.mrb[0].mxu0 %v2236
    %v2411 = vpop.f32.mrb[0].mxu0
    %v2412 = vadd.f32 %v2279, %v2411
    %v2413 = vpop.f32.mrb[0].mxu0
    %v2414 = vpop.f32.mrb[0].mxu0
    %v2415 = vadd.f32 %v2279, %v2414
    %v2416 = vpop.f32.mrb[0].mxu0
    %2417 = vmatprep.mubr.bf16.mxu0 %v2239
    %2418 = vmatmul.mubr.bf16.gmra.mrb[0].mxu0 %v2238
    %v2419 = vpop.f32.mrb[0].mxu0
    %v2420 = vadd.f32 %v2279, %v2419
    %v2421 = vpop.f32.mrb[0].mxu0
    %v2422 = vpop.f32.mrb[0].mxu0
    %v2423 = vadd.f32 %v2279, %v2422
    %v2424 = vpop.f32.mrb[0].mxu0
    %2425 = vmatprep.mubr.bf16.mxu0 %v2241
    %2426 = vmatmul.mubr.bf16.gmra.mrb[0].mxu0 %v2240
    %v2427 = vpop.f32.mrb[0].mxu0
    %v2428 = vadd.f32 %v2279, %v2427
    %v2429 = vpop.f32.mrb[0].mxu0
    %v2430 = vpop.f32.mrb[0].mxu0
    %v2431 = vpop.f32.mrb[0].mxu0
    %2432 = vdwg.mxu0
    %2433 = vst [vmem:[%s5] sm:$0xff] %v2412
    %2434 = vst [vmem:[%s5 + $0x8] sm:$0xff] %v2415
    %2435 = vst [vmem:[%s5 + $0x10] sm:$0xff] %v2420
    %2436 = vst [vmem:[%s5 + $0x18] sm:$0xff] %v2423
    %2437 = vst [vmem:[%s5 + $0x20] sm:$0xff] %v2428
    // Predicated region
    $region34: #{mlp_classifier_forward.1} parent=1 // pred_check
      _
    $region35: #{mlp_classifier_forward.1} parent=1 // pred_check_branch
      %2439 = sbr.rel (0) target = $region37
    $region36: #{mlp_classifier_forward.1} parent=1 // pred_region
      _
    $region37: #{mlp_classifier_forward.1} parent=1 // pred_fallthru
      _
    // Predicated region
    $region38: #{mlp_classifier_forward.1} parent=1 // pred_check
      _
    $region39: #{mlp_classifier_forward.1} parent=1 // pred_check_branch
      %2441 = sbr.rel (0) target = $region41
    $region40: #{mlp_classifier_forward.1} parent=1 // pred_region
      _
    $region41: #{mlp_classifier_forward.1} parent=1 // pred_fallthru
      _
    %2442 = vsyncpa [#allocation3], 1
    %2443 = vsyncpa [#allocation5], 1

</llo_original>
